<compile_context>
chip_gen: v5e
topology: v5e:2x2
jax: 0.10.0
libtpu: 0.0.40
codegen_flags: <defaults>
</compile_context>

<pallas_src>
import math
import functools

import jax
import jax.numpy as jnp
from jax.experimental import pallas as pl
from jax.experimental.pallas import tpu as pltpu


def _round_up(x, m):
    return ((x + m - 1) // m) * m


# ---------------------------------------------------------------------------
# Hardware query + tile-size derivation
# ---------------------------------------------------------------------------

def _tpu_vmem_and_multicore():
    """Returns (physical VMEM bytes per TensorCore, needs >=2 grid steps?)."""
    kind = ""
    try:
        kind = jax.devices()[0].device_kind.lower()
    except Exception:
        pass
    single_core = any(t in kind for t in
                      ("v5e", "v5 lite", "v5lite", "v6e", "v6 lite", "v6lite"))
    # 128 MiB per TC on v5e/v6e; 64 MiB per TC on v7x (conservative default).
    vmem_cap = (128 if single_core else 64) * 1024 * 1024
    try:
        vmem_cap = int(pltpu.get_tpu_info().vmem_capacity_bytes)
    except Exception:
        pass
    return vmem_cap, (not single_core)


def _per_batch_vmem_bytes(Nq, Nk, dim_Q, dim_K, dim_V, dim_V_pad, num_heads):
    """Rough per-batch-element VMEM footprint of one grid step (bytes)."""
    tiles = 2 * (Nq * dim_Q + Nk * dim_K) * 2        # bf16 in-tiles, double buffered
    tiles += 2 * Nq * dim_V_pad * 4                  # f32 out tile, double buffered
    inter = 4 * (Nq * dim_V_pad                      # Qp
                 + 2 * Nk * dim_V_pad                # K/V projections
                 + 3 * num_heads * Nq * Nk           # scores / exp / probs
                 + 2 * Nq * dim_V                    # head outputs
                 + 2 * Nq * dim_V_pad)               # O, out
    return tiles + 2 * inter                         # 2x headroom for compiler temps


def _choose_tb(B, Nq, per_batch_bytes, budget_bytes, multi_core, target_m=512):
    """Batch-tile size: aim for M = tb*Nq ~ 512 rows (near HBM roofline for the
    big matmuls), subject to the VMEM budget; on multi-TensorCore chips keep
    >= 2 (preferably an even number of) grid steps so both cores stay busy."""
    divisors = [d for d in range(1, B + 1) if B % d == 0]

    def grid_ok(tb):
        return (B // tb >= 2) if (multi_core and B >= 2) else True

    cands = [d for d in divisors if grid_ok(d) and d * per_batch_bytes <= budget_bytes]
    if not cands:
        cands = [d for d in divisors if grid_ok(d)] or [1]

    def score(tb):
        m = tb * Nq
        steps = B // tb
        reach = 1 if m >= target_m else 0
        even = 1 if (not multi_core or steps <= 1 or steps % 2 == 0) else 0
        return (reach, even, -abs(m - target_m))

    return max(cands, key=score)


# ---------------------------------------------------------------------------
# Kernel
# ---------------------------------------------------------------------------

def _mab_kernel(q_ref, k_ref,
                wq_ref, bq_ref, wkv_ref, bkv_ref, wo_ref, bo_ref,
                out_ref,
                *, num_heads, dim_V, dim_V_pad, tb, Nq, Nk, head_batched):
    M = tb * Nq
    Mk = tb * Nk
    H = num_heads
    ds = dim_V // H

    # (TB, N, d) -> (TB*N, d): leading-dim merge; inputs already bf16 (host cast).
    q2 = q_ref[...].reshape(M, q_ref.shape[-1])
    k2 = k_ref[...].reshape(Mk, k_ref.shape[-1])

    # Input projections with f32 accumulation. K/V are fused into one weight;
    # the 1/sqrt(dim_V) score scale is pre-folded into the K half on the host.
    Qp = jnp.dot(q2, wq_ref[...], preferred_element_type=jnp.float32) + bq_ref[...]
    KVp = jnp.dot(k2, wkv_ref[...], preferred_element_type=jnp.float32) + bkv_ref[...]

    Qp3 = Qp.reshape(tb, Nq, dim_V_pad)                       # pad lanes exactly 0
    Kp3 = KVp[:, :dim_V_pad].reshape(tb, Nk, dim_V_pad)       # pre-scaled for scores
    Vp3 = KVp[:, dim_V_pad:].reshape(tb, Nk, dim_V_pad)

    if head_batched:
        # All heads in two batched MXU contractions (batched over (batch, head)).
        Q4 = Qp3[:, :, :dim_V].reshape(tb, Nq, H, ds).astype(jnp.bfloat16)
        K4 = Kp3[:, :, :dim_V].reshape(tb, Nk, H, ds).astype(jnp.bfloat16)
        V4 = Vp3[:, :, :dim_V].reshape(tb, Nk, H, ds).astype(jnp.bfloat16)
        S = jnp.einsum('bqhd,bkhd->bhqk', Q4, K4,
                       preferred_element_type=jnp.float32)        # (tb,H,Nq,Nk)
        S = S - jnp.max(S, axis=-1, keepdims=True)
        E = jnp.exp(S)
        A = E * pl.reciprocal(jnp.sum(E, axis=-1, keepdims=True), approx=False)
        PV = jnp.einsum('bhqk,bkhd->bqhd', A.astype(jnp.bfloat16), V4,
                        preferred_element_type=jnp.float32)       # (tb,Nq,H,ds)
        head_out = [PV.reshape(tb, Nq, dim_V)]
    else:
        # Fallback: per-head loop with single-batch-dim contractions.
        head_out = []
        for h in range(H):
            lo, hi = h * ds, (h + 1) * ds
            Qh = Qp3[:, :, lo:hi].astype(jnp.bfloat16)
            Kh = Kp3[:, :, lo:hi].astype(jnp.bfloat16)
            Vh = Vp3[:, :, lo:hi].astype(jnp.bfloat16)
            S = jnp.einsum('bqd,bkd->bqk', Qh, Kh,
                           preferred_element_type=jnp.float32)    # (tb,Nq,Nk)
            S = S - jnp.max(S, axis=-1, keepdims=True)
            E = jnp.exp(S)
            A = E * pl.reciprocal(jnp.sum(E, axis=-1, keepdims=True), approx=False)
            head_out.append(jnp.einsum('bqk,bkd->bqd', A.astype(jnp.bfloat16), Vh,
                                       preferred_element_type=jnp.float32))

    # Residual + lane padding back to dim_V_pad.  The padded lanes of Qp3 are
    # exact zeros (weights/bias zero-padded on the host), so O's pad lanes are
    # explicit zeros before the fc_o matmul and the final store.
    pad = dim_V_pad - dim_V
    if pad:
        head_out = head_out + [jnp.zeros((tb, Nq, pad), jnp.float32)]
    PV_full = head_out[0] if len(head_out) == 1 else jnp.concatenate(head_out, axis=-1)
    O = Qp3 + PV_full                                 # (tb, Nq, dim_V_pad), f32, vregs

    # O = O + relu(fc_o(O)); O stays register-resident, one lane-dense store.
    O2 = O.reshape(M, dim_V_pad)
    proj = jnp.dot(O2.astype(jnp.bfloat16), wo_ref[...],
                   preferred_element_type=jnp.float32) + bo_ref[...]
    out2 = O2 + jnp.maximum(proj, 0.0)
    out_ref[...] = out2.reshape(tb, Nq, dim_V_pad).astype(out_ref.dtype)


# ---------------------------------------------------------------------------
# Wrapper
# ---------------------------------------------------------------------------

def _build_call(*, head_batched, weight_buffers, B, Nq, Nk, dim_Q, dim_K,
                dim_V, dim_V_pad, num_heads, tb, out_dtype, vmem_limit, weights):
    wq, bq, wkv, bkv, wo, bo = weights
    kernel = functools.partial(
        _mab_kernel, num_heads=num_heads, dim_V=dim_V, dim_V_pad=dim_V_pad,
        tb=tb, Nq=Nq, Nk=Nk, head_batched=head_batched)

    def wspec(a):
        # Grid-invariant weights: constant index_map (never re-DMA'd). Single-
        # buffer them to halve their VMEM footprint (matters on v7x's 64 MiB
        # VMEM at production dims); falls back to default specs if unsupported.
        if weight_buffers is None:
            return pl.BlockSpec(a.shape, lambda b: (0, 0))
        return pl.BlockSpec(a.shape, lambda b: (0, 0),
                            pipeline_mode=pl.Buffered(weight_buffers))

    return pl.pallas_call(
        kernel,
        out_shape=jax.ShapeDtypeStruct((B, Nq, dim_V_pad), out_dtype),
        grid_spec=pltpu.PrefetchScalarGridSpec(
            num_scalar_prefetch=0,
            grid=(B // tb,),
            in_specs=[
                pl.BlockSpec((tb, Nq, dim_Q), lambda b: (b, 0, 0)),   # Q tile
                pl.BlockSpec((tb, Nk, dim_K), lambda b: (b, 0, 0)),   # K tile
                wspec(wq), wspec(bq), wspec(wkv), wspec(bkv), wspec(wo), wspec(bo),
            ],
            out_specs=pl.BlockSpec((tb, Nq, dim_V_pad), lambda b: (b, 0, 0)),
        ),
        compiler_params=pltpu.CompilerParams(
            dimension_semantics=("parallel",),
            vmem_limit_bytes=int(vmem_limit)),
    )


_BEST_CFG = {}


def mab_forward(Q, K, packed, *, num_heads):
    """Pallas MAB forward. Q: (B, Nq, dim_Q), K: (B, Nk, dim_K) -> (B, Nq, dim_V)."""
    B, Nq, dim_Q = Q.shape
    Bk, Nk, dim_K = K.shape
    assert B == Bk, "Q and K must share the batch dimension"
    wq, bq, wkv, bkv, wo, bo, dim_V, dim_V_pad = packed
    assert dim_V % num_heads == 0, "dim_V must be divisible by num_heads"
    assert Nq % 8 == 0 and Nk % 8 == 0, \
        "Nq/Nk must be multiples of 8 (sublane tile) for the leading-dim merge"

    # Halve input DMA bytes and drop in-kernel casts: matmuls run in bf16 anyway.
    Qb = Q.astype(jnp.bfloat16)
    Kb = K.astype(jnp.bfloat16)

    vmem_cap, multi_core = _tpu_vmem_and_multicore()
    vmem_limit = min(vmem_cap * 3 // 4, 100 * 1024 * 1024)
    weight_bytes = sum(int(a.size) * a.dtype.itemsize
                       for a in (wq, bq, wkv, bkv, wo, bo))
    budget = max(vmem_limit - 2 * weight_bytes - (1 << 20), 1 << 20)
    per_b = _per_batch_vmem_bytes(Nq, Nk, dim_Q, dim_K, dim_V, dim_V_pad, num_heads)
    tb = _choose_tb(B, Nq, per_b, budget, multi_core)

    cfg_key = (B, Nq, Nk, dim_Q, dim_K, dim_V, num_heads)
    attempts = ([_BEST_CFG[cfg_key]] if cfg_key in _BEST_CFG else
                [(True, 1), (True, None), (False, 1), (False, None)])

    last_err = None
    for head_batched, wbuf in attempts:
        try:
            call = _build_call(
                head_batched=head_batched, weight_buffers=wbuf,
                B=B, Nq=Nq, Nk=Nk, dim_Q=dim_Q, dim_K=dim_K, dim_V=dim_V,
                dim_V_pad=dim_V_pad, num_heads=num_heads, tb=tb,
                out_dtype=jnp.float32, vmem_limit=vmem_limit,
                weights=(wq, bq, wkv, bkv, wo, bo))
            out_pad = jax.block_until_ready(call(Qb, Kb, wq, bq, wkv, bkv, wo, bo))
            _BEST_CFG[cfg_key] = (head_batched, wbuf)
            # Drop the lane padding (host-side slice).
            return out_pad[..., :dim_V].astype(Q.dtype)
        except Exception as err:
            # Variant not supported by the installed Pallas/Mosaic (e.g. batched
            # contraction lowering or pl.Buffered) -- try the next one.
            last_err = err
    raise last_err


# ---------------------------------------------------------------------------
# Host-side parameter packing, reference, init
# ---------------------------------------------------------------------------

def pack_params(params, *, num_heads, dim_V):
    """Host-side packing: pad features to 128 lanes, fuse K/V weights, fold
    the 1/sqrt(dim_V) score scale into the K projection, cast weights to bf16."""
    wq_t, bq, wk_t, bk, wv_t, bv, wo_t, bo = params
    dim_V_pad = _round_up(dim_V, 128)
    scale = 1.0 / math.sqrt(dim_V)

    def pad_cols(w, width):
        return jnp.pad(w, ((0, 0), (0, width - w.shape[1])))

    wq_p = pad_cols(wq_t, dim_V_pad).astype(jnp.bfloat16)
    bq_p = pad_cols(bq, dim_V_pad)                               # f32 (1, dV_pad)

    wkv_p = jnp.concatenate([pad_cols(wk_t * scale, dim_V_pad),
                             pad_cols(wv_t, dim_V_pad)], axis=1).astype(jnp.bfloat16)
    bkv_p = jnp.concatenate([pad_cols(bk * scale, dim_V_pad),
                             pad_cols(bv, dim_V_pad)], axis=1)   # f32 (1, 2*dV_pad)

    wo_p = jnp.pad(wo_t, ((0, dim_V_pad - dim_V),
                          (0, dim_V_pad - dim_V))).astype(jnp.bfloat16)
    bo_p = pad_cols(bo, dim_V_pad)

    return (wq_p, bq_p, wkv_p, bkv_p, wo_p, bo_p, dim_V, dim_V_pad)


def mab_reference(Q, K, params, *, num_heads):
    """Pure-JAX f32 reference mirroring the PyTorch forward exactly."""
    wq_t, bq, wk_t, bk, wv_t, bv, wo_t, bo = params
    dim_V = wq_t.shape[1]
    Qp = Q @ wq_t + bq
    Kp = K @ wk_t + bk
    Vp = K @ wv_t + bv
    ds = dim_V // num_heads
    # torch.cat(X.split(ds, 2), 0): (B, N, dV) -> (h*B, N, ds)
    split = lambda X: jnp.concatenate(jnp.split(X, num_heads, axis=2), axis=0)
    Q_, K_, V_ = split(Qp), split(Kp), split(Vp)
    A = jax.nn.softmax(jnp.einsum('bqd,bkd->bqk', Q_, K_) / math.sqrt(dim_V), axis=2)
    O = Q_ + jnp.einsum('bqk,bkd->bqd', A, V_)
    # torch.cat(O.split(B, 0), 2): (h*B, Nq, ds) -> (B, Nq, dV)
    O = jnp.concatenate(jnp.split(O, num_heads, axis=0), axis=2)
    O = O + jax.nn.relu(O @ wo_t + bo)
    return O


def init_params(key, dim_Q, dim_K, dim_V):
    """Deterministic Linear inits (uniform, Kaiming-style bounds like PyTorch)."""
    ks = jax.random.split(key, 8)

    def linear(kw, kb, d_in, d_out):
        bound = 1.0 / math.sqrt(d_in)
        w = jax.random.uniform(kw, (d_out, d_in), jnp.float32, -bound, bound)
        b = jax.random.uniform(kb, (d_out,), jnp.float32, -bound, bound)
        return w.T, b.reshape(1, d_out)     # pre-transposed weight, 2D bias

    wq_t, bq = linear(ks[0], ks[1], dim_Q, dim_V)
    wk_t, bk = linear(ks[2], ks[3], dim_K, dim_V)
    wv_t, bv = linear(ks[4], ks[5], dim_K, dim_V)
    wo_t, bo = linear(ks[6], ks[7], dim_V, dim_V)
    return (wq_t, bq, wk_t, bk, wv_t, bv, wo_t, bo)


if __name__ == "__main__":
    B, Nq, Nk = 2, 8, 8
    dim_Q, dim_K, dim_V, num_heads = 16, 16, 32, 4

    key = jax.random.PRNGKey(0)
    kq, kk, kp = jax.random.split(key, 3)
    Q = jax.random.normal(kq, (B, Nq, dim_Q), jnp.float32)
    K = jax.random.normal(kk, (B, Nk, dim_K), jnp.float32)
    raw_params = init_params(kp, dim_Q, dim_K, dim_V)
    packed = pack_params(raw_params, num_heads=num_heads, dim_V=dim_V)

    out = mab_forward(Q, K, packed, num_heads=num_heads)
    out = jax.block_until_ready(out)

    ref = mab_reference(Q, K, raw_params, num_heads=num_heads)
    assert out.shape == (B, Nq, dim_V)
    max_err = float(jnp.max(jnp.abs(out - ref)))
    # bf16 MXU matmuls vs f32 reference; exact softmax reciprocal (approx=False)
    # tightens the tolerance vs the previous 5e-2.
    assert jnp.allclose(out, ref, atol=4e-2, rtol=4e-2), \
        f"mismatch vs reference (max abs err {max_err})"

    print("KERNEL_OK")
</pallas_src>

<mosaic_0001>
module attributes {stable_mosaic.version = 11 : i64} {
  func.func @_mab_kernel(%arg0: i32, %arg1: memref<1x8x16xbf16, #tpu.memory_space<vmem>>, %arg2: memref<1x8x16xbf16, #tpu.memory_space<vmem>>, %arg3: memref<16x128xbf16, #tpu.memory_space<vmem>>, %arg4: memref<1x128xf32, #tpu.memory_space<vmem>>, %arg5: memref<16x256xbf16, #tpu.memory_space<vmem>>, %arg6: memref<1x256xf32, #tpu.memory_space<vmem>>, %arg7: memref<128x128xbf16, #tpu.memory_space<vmem>>, %arg8: memref<1x128xf32, #tpu.memory_space<vmem>>, %arg9: memref<1x8x128xf32, #tpu.memory_space<vmem>>) attributes {dimension_semantics = [#tpu.dimension_semantics<parallel>], iteration_bounds = array<i64: 2>, scalar_prefetch = 0 : i64, scratch_operands = 0 : i64, tpu.core_type = #tpu.core_type<tc>, window_params = [{transform_indices = @transform_0, window_bounds = array<i64: 1, 8, 16>}, {transform_indices = @transform_1, window_bounds = array<i64: 1, 8, 16>}, {pipeline_mode = #tpu.pipeline_mode<synchronous>, transform_indices = @transform_2, window_bounds = array<i64: 16, 128>}, {pipeline_mode = #tpu.pipeline_mode<synchronous>, transform_indices = @transform_3, window_bounds = array<i64: 1, 128>}, {pipeline_mode = #tpu.pipeline_mode<synchronous>, transform_indices = @transform_4, window_bounds = array<i64: 16, 256>}, {pipeline_mode = #tpu.pipeline_mode<synchronous>, transform_indices = @transform_5, window_bounds = array<i64: 1, 256>}, {pipeline_mode = #tpu.pipeline_mode<synchronous>, transform_indices = @transform_6, window_bounds = array<i64: 128, 128>}, {pipeline_mode = #tpu.pipeline_mode<synchronous>, transform_indices = @transform_7, window_bounds = array<i64: 1, 128>}, {transform_indices = @transform_8, window_bounds = array<i64: 1, 8, 128>}]} {
    %c0 = arith.constant 0 : index
    %c0_0 = arith.constant 0 : index
    %c0_1 = arith.constant 0 : index
    %0 = vector.load %arg1[%c0, %c0_0, %c0_1] : memref<1x8x16xbf16, #tpu.memory_space<vmem>>, vector<1x8x16xbf16>
    %1 = vector.shape_cast %0 : vector<1x8x16xbf16> to vector<8x16xbf16>
    %c0_2 = arith.constant 0 : index
    %c0_3 = arith.constant 0 : index
    %c0_4 = arith.constant 0 : index
    %2 = vector.load %arg2[%c0_2, %c0_3, %c0_4] : memref<1x8x16xbf16, #tpu.memory_space<vmem>>, vector<1x8x16xbf16>
    %3 = vector.shape_cast %2 : vector<1x8x16xbf16> to vector<8x16xbf16>
    %c0_5 = arith.constant 0 : index
    %c0_6 = arith.constant 0 : index
    %4 = vector.load %arg3[%c0_5, %c0_6] : memref<16x128xbf16, #tpu.memory_space<vmem>>, vector<16x128xbf16>
    %cst = arith.constant dense<0.000000e+00> : vector<8x128xf32>
    %5 = tpu.matmul %1, %4, %cst {dimension_numbers = #tpu.dot_dimension_numbers<[1], [0], [0], [1], [0, 0, 1, 1], [], []>} : vector<8x16xbf16>, vector<16x128xbf16>, vector<8x128xf32> -> vector<8x128xf32>
    %c0_7 = arith.constant 0 : index
    %c0_8 = arith.constant 0 : index
    %6 = vector.load %arg4[%c0_7, %c0_8] : memref<1x128xf32, #tpu.memory_space<vmem>>, vector<1x128xf32>
    %7 = vector.broadcast %6 : vector<1x128xf32> to vector<8x128xf32>
    %8 = arith.addf %5, %7 : vector<8x128xf32>
    %c0_9 = arith.constant 0 : index
    %c0_10 = arith.constant 0 : index
    %9 = vector.load %arg5[%c0_9, %c0_10] : memref<16x256xbf16, #tpu.memory_space<vmem>>, vector<16x256xbf16>
    %cst_11 = arith.constant dense<0.000000e+00> : vector<8x256xf32>
    %10 = tpu.matmul %3, %9, %cst_11 {dimension_numbers = #tpu.dot_dimension_numbers<[1], [0], [0], [1], [0, 0, 1, 1], [], []>} : vector<8x16xbf16>, vector<16x256xbf16>, vector<8x256xf32> -> vector<8x256xf32>
    %c0_12 = arith.constant 0 : index
    %c0_13 = arith.constant 0 : index
    %11 = vector.load %arg6[%c0_12, %c0_13] : memref<1x256xf32, #tpu.memory_space<vmem>>, vector<1x256xf32>
    %12 = vector.broadcast %11 : vector<1x256xf32> to vector<8x256xf32>
    %13 = arith.addf %10, %12 : vector<8x256xf32>
    %14 = vector.shape_cast %8 : vector<8x128xf32> to vector<1x8x128xf32>
    %15 = vector.extract_strided_slice %13 {offsets = [0, 0], sizes = [8, 128], strides = [1, 1]} : vector<8x256xf32> to vector<8x128xf32>
    %16 = vector.shape_cast %15 : vector<8x128xf32> to vector<1x8x128xf32>
    %17 = vector.extract_strided_slice %13 {offsets = [0, 128], sizes = [8, 128], strides = [1, 1]} : vector<8x256xf32> to vector<8x128xf32>
    %18 = vector.shape_cast %17 : vector<8x128xf32> to vector<1x8x128xf32>
    %19 = vector.extract_strided_slice %14 {offsets = [0, 0, 0], sizes = [1, 8, 8], strides = [1, 1, 1]} : vector<1x8x128xf32> to vector<1x8x8xf32>
    %20 = arith.truncf %19 : vector<1x8x8xf32> to vector<1x8x8xbf16>
    %21 = vector.extract_strided_slice %16 {offsets = [0, 0, 0], sizes = [1, 8, 8], strides = [1, 1, 1]} : vector<1x8x128xf32> to vector<1x8x8xf32>
    %22 = arith.truncf %21 : vector<1x8x8xf32> to vector<1x8x8xbf16>
    %23 = vector.extract_strided_slice %18 {offsets = [0, 0, 0], sizes = [1, 8, 8], strides = [1, 1, 1]} : vector<1x8x128xf32> to vector<1x8x8xf32>
    %24 = arith.truncf %23 : vector<1x8x8xf32> to vector<1x8x8xbf16>
    "tpu.trace_start"() <{level = 10 : i32, message = "bqd,bkd->bqk"}> : () -> ()
    %cst_14 = arith.constant dense<0.000000e+00> : vector<1x8x8xf32>
    %25 = tpu.matmul %20, %22, %cst_14 {dimension_numbers = #tpu.dot_dimension_numbers<[2], [2], [1], [1], [0, 0, 0, 1, 1, 1], [0], [0]>} : vector<1x8x8xbf16>, vector<1x8x8xbf16>, vector<1x8x8xf32> -> vector<1x8x8xf32>
    "tpu.trace_stop"() : () -> ()
    %cst_15 = arith.constant dense<0xFF800000> : vector<1x8xf32>
    %26 = vector.multi_reduction <maximumf>, %25, %cst_15 [2] : vector<1x8x8xf32> to vector<1x8xf32>
    %27 = vector.shape_cast %26 : vector<1x8xf32> to vector<1x8x1xf32>
    %28 = vector.broadcast %27 : vector<1x8x1xf32> to vector<1x8x8xf32>
    %29 = arith.subf %25, %28 : vector<1x8x8xf32>
    %30 = math.exp %29 : vector<1x8x8xf32>
    %cst_16 = arith.constant dense<0.000000e+00> : vector<1x8xf32>
    %31 = vector.multi_reduction <add>, %30, %cst_16 [2] : vector<1x8x8xf32> to vector<1x8xf32>
    %32 = vector.shape_cast %31 : vector<1x8xf32> to vector<1x8x1xf32>
    %33 = tpu.reciprocal %32 : vector<1x8x1xf32> -> vector<1x8x1xf32>
    %34 = vector.broadcast %33 : vector<1x8x1xf32> to vector<1x8x8xf32>
    %35 = arith.mulf %30, %34 : vector<1x8x8xf32>
    %36 = arith.truncf %35 : vector<1x8x8xf32> to vector<1x8x8xbf16>
    "tpu.trace_start"() <{level = 10 : i32, message = "bqk,bkd->bqd"}> : () -> ()
    %cst_17 = arith.constant dense<0.000000e+00> : vector<1x8x8xf32>
    %37 = tpu.matmul %36, %24, %cst_17 {dimension_numbers = #tpu.dot_dimension_numbers<[2], [1], [1], [2], [0, 0, 0, 1, 1, 2], [0], [0]>} : vector<1x8x8xbf16>, vector<1x8x8xbf16>, vector<1x8x8xf32> -> vector<1x8x8xf32>
    "tpu.trace_stop"() : () -> ()
    %38 = vector.extract_strided_slice %14 {offsets = [0, 0, 8], sizes = [1, 8, 8], strides = [1, 1, 1]} : vector<1x8x128xf32> to vector<1x8x8xf32>
    %39 = arith.truncf %38 : vector<1x8x8xf32> to vector<1x8x8xbf16>
    %40 = vector.extract_strided_slice %16 {offsets = [0, 0, 8], sizes = [1, 8, 8], strides = [1, 1, 1]} : vector<1x8x128xf32> to vector<1x8x8xf32>
    %41 = arith.truncf %40 : vector<1x8x8xf32> to vector<1x8x8xbf16>
    %42 = vector.extract_strided_slice %18 {offsets = [0, 0, 8], sizes = [1, 8, 8], strides = [1, 1, 1]} : vector<1x8x128xf32> to vector<1x8x8xf32>
    %43 = arith.truncf %42 : vector<1x8x8xf32> to vector<1x8x8xbf16>
    "tpu.trace_start"() <{level = 10 : i32, message = "bqd,bkd->bqk"}> : () -> ()
    %cst_18 = arith.constant dense<0.000000e+00> : vector<1x8x8xf32>
    %44 = tpu.matmul %39, %41, %cst_18 {dimension_numbers = #tpu.dot_dimension_numbers<[2], [2], [1], [1], [0, 0, 0, 1, 1, 1], [0], [0]>} : vector<1x8x8xbf16>, vector<1x8x8xbf16>, vector<1x8x8xf32> -> vector<1x8x8xf32>
    "tpu.trace_stop"() : () -> ()
    %cst_19 = arith.constant dense<0xFF800000> : vector<1x8xf32>
    %45 = vector.multi_reduction <maximumf>, %44, %cst_19 [2] : vector<1x8x8xf32> to vector<1x8xf32>
    %46 = vector.shape_cast %45 : vector<1x8xf32> to vector<1x8x1xf32>
    %47 = vector.broadcast %46 : vector<1x8x1xf32> to vector<1x8x8xf32>
    %48 = arith.subf %44, %47 : vector<1x8x8xf32>
    %49 = math.exp %48 : vector<1x8x8xf32>
    %cst_20 = arith.constant dense<0.000000e+00> : vector<1x8xf32>
    %50 = vector.multi_reduction <add>, %49, %cst_20 [2] : vector<1x8x8xf32> to vector<1x8xf32>
    %51 = vector.shape_cast %50 : vector<1x8xf32> to vector<1x8x1xf32>
    %52 = tpu.reciprocal %51 : vector<1x8x1xf32> -> vector<1x8x1xf32>
    %53 = vector.broadcast %52 : vector<1x8x1xf32> to vector<1x8x8xf32>
    %54 = arith.mulf %49, %53 : vector<1x8x8xf32>
    %55 = arith.truncf %54 : vector<1x8x8xf32> to vector<1x8x8xbf16>
    "tpu.trace_start"() <{level = 10 : i32, message = "bqk,bkd->bqd"}> : () -> ()
    %cst_21 = arith.constant dense<0.000000e+00> : vector<1x8x8xf32>
    %56 = tpu.matmul %55, %43, %cst_21 {dimension_numbers = #tpu.dot_dimension_numbers<[2], [1], [1], [2], [0, 0, 0, 1, 1, 2], [0], [0]>} : vector<1x8x8xbf16>, vector<1x8x8xbf16>, vector<1x8x8xf32> -> vector<1x8x8xf32>
    "tpu.trace_stop"() : () -> ()
    %57 = vector.extract_strided_slice %14 {offsets = [0, 0, 16], sizes = [1, 8, 8], strides = [1, 1, 1]} : vector<1x8x128xf32> to vector<1x8x8xf32>
    %58 = arith.truncf %57 : vector<1x8x8xf32> to vector<1x8x8xbf16>
    %59 = vector.extract_strided_slice %16 {offsets = [0, 0, 16], sizes = [1, 8, 8], strides = [1, 1, 1]} : vector<1x8x128xf32> to vector<1x8x8xf32>
    %60 = arith.truncf %59 : vector<1x8x8xf32> to vector<1x8x8xbf16>
    %61 = vector.extract_strided_slice %18 {offsets = [0, 0, 16], sizes = [1, 8, 8], strides = [1, 1, 1]} : vector<1x8x128xf32> to vector<1x8x8xf32>
    %62 = arith.truncf %61 : vector<1x8x8xf32> to vector<1x8x8xbf16>
    "tpu.trace_start"() <{level = 10 : i32, message = "bqd,bkd->bqk"}> : () -> ()
    %cst_22 = arith.constant dense<0.000000e+00> : vector<1x8x8xf32>
    %63 = tpu.matmul %58, %60, %cst_22 {dimension_numbers = #tpu.dot_dimension_numbers<[2], [2], [1], [1], [0, 0, 0, 1, 1, 1], [0], [0]>} : vector<1x8x8xbf16>, vector<1x8x8xbf16>, vector<1x8x8xf32> -> vector<1x8x8xf32>
    "tpu.trace_stop"() : () -> ()
    %cst_23 = arith.constant dense<0xFF800000> : vector<1x8xf32>
    %64 = vector.multi_reduction <maximumf>, %63, %cst_23 [2] : vector<1x8x8xf32> to vector<1x8xf32>
    %65 = vector.shape_cast %64 : vector<1x8xf32> to vector<1x8x1xf32>
    %66 = vector.broadcast %65 : vector<1x8x1xf32> to vector<1x8x8xf32>
    %67 = arith.subf %63, %66 : vector<1x8x8xf32>
    %68 = math.exp %67 : vector<1x8x8xf32>
    %cst_24 = arith.constant dense<0.000000e+00> : vector<1x8xf32>
    %69 = vector.multi_reduction <add>, %68, %cst_24 [2] : vector<1x8x8xf32> to vector<1x8xf32>
    %70 = vector.shape_cast %69 : vector<1x8xf32> to vector<1x8x1xf32>
    %71 = tpu.reciprocal %70 : vector<1x8x1xf32> -> vector<1x8x1xf32>
    %72 = vector.broadcast %71 : vector<1x8x1xf32> to vector<1x8x8xf32>
    %73 = arith.mulf %68, %72 : vector<1x8x8xf32>
    %74 = arith.truncf %73 : vector<1x8x8xf32> to vector<1x8x8xbf16>
    "tpu.trace_start"() <{level = 10 : i32, message = "bqk,bkd->bqd"}> : () -> ()
    %cst_25 = arith.constant dense<0.000000e+00> : vector<1x8x8xf32>
    %75 = tpu.matmul %74, %62, %cst_25 {dimension_numbers = #tpu.dot_dimension_numbers<[2], [1], [1], [2], [0, 0, 0, 1, 1, 2], [0], [0]>} : vector<1x8x8xbf16>, vector<1x8x8xbf16>, vector<1x8x8xf32> -> vector<1x8x8xf32>
    "tpu.trace_stop"() : () -> ()
    %76 = vector.extract_strided_slice %14 {offsets = [0, 0, 24], sizes = [1, 8, 8], strides = [1, 1, 1]} : vector<1x8x128xf32> to vector<1x8x8xf32>
    %77 = arith.truncf %76 : vector<1x8x8xf32> to vector<1x8x8xbf16>
    %78 = vector.extract_strided_slice %16 {offsets = [0, 0, 24], sizes = [1, 8, 8], strides = [1, 1, 1]} : vector<1x8x128xf32> to vector<1x8x8xf32>
    %79 = arith.truncf %78 : vector<1x8x8xf32> to vector<1x8x8xbf16>
    %80 = vector.extract_strided_slice %18 {offsets = [0, 0, 24], sizes = [1, 8, 8], strides = [1, 1, 1]} : vector<1x8x128xf32> to vector<1x8x8xf32>
    %81 = arith.truncf %80 : vector<1x8x8xf32> to vector<1x8x8xbf16>
    "tpu.trace_start"() <{level = 10 : i32, message = "bqd,bkd->bqk"}> : () -> ()
    %cst_26 = arith.constant dense<0.000000e+00> : vector<1x8x8xf32>
    %82 = tpu.matmul %77, %79, %cst_26 {dimension_numbers = #tpu.dot_dimension_numbers<[2], [2], [1], [1], [0, 0, 0, 1, 1, 1], [0], [0]>} : vector<1x8x8xbf16>, vector<1x8x8xbf16>, vector<1x8x8xf32> -> vector<1x8x8xf32>
    "tpu.trace_stop"() : () -> ()
    %cst_27 = arith.constant dense<0xFF800000> : vector<1x8xf32>
    %83 = vector.multi_reduction <maximumf>, %82, %cst_27 [2] : vector<1x8x8xf32> to vector<1x8xf32>
    %84 = vector.shape_cast %83 : vector<1x8xf32> to vector<1x8x1xf32>
    %85 = vector.broadcast %84 : vector<1x8x1xf32> to vector<1x8x8xf32>
    %86 = arith.subf %82, %85 : vector<1x8x8xf32>
    %87 = math.exp %86 : vector<1x8x8xf32>
    %cst_28 = arith.constant dense<0.000000e+00> : vector<1x8xf32>
    %88 = vector.multi_reduction <add>, %87, %cst_28 [2] : vector<1x8x8xf32> to vector<1x8xf32>
    %89 = vector.shape_cast %88 : vector<1x8xf32> to vector<1x8x1xf32>
    %90 = tpu.reciprocal %89 : vector<1x8x1xf32> -> vector<1x8x1xf32>
    %91 = vector.broadcast %90 : vector<1x8x1xf32> to vector<1x8x8xf32>
    %92 = arith.mulf %87, %91 : vector<1x8x8xf32>
    %93 = arith.truncf %92 : vector<1x8x8xf32> to vector<1x8x8xbf16>
    "tpu.trace_start"() <{level = 10 : i32, message = "bqk,bkd->bqd"}> : () -> ()
    %cst_29 = arith.constant dense<0.000000e+00> : vector<1x8x8xf32>
    %94 = tpu.matmul %93, %81, %cst_29 {dimension_numbers = #tpu.dot_dimension_numbers<[2], [1], [1], [2], [0, 0, 0, 1, 1, 2], [0], [0]>} : vector<1x8x8xbf16>, vector<1x8x8xbf16>, vector<1x8x8xf32> -> vector<1x8x8xf32>
    %cst_30 = arith.constant 0.000000e+00 : f32
    "tpu.trace_stop"() : () -> ()
    %95 = vector.broadcast %cst_30 : f32 to vector<1x8x96xf32>
    %96 = tpu.concatenate %37, %56, %75, %94, %95 in 2 : vector<1x8x8xf32>, vector<1x8x8xf32>, vector<1x8x8xf32>, vector<1x8x8xf32>, vector<1x8x96xf32> -> vector<1x8x128xf32>
    %97 = arith.addf %14, %96 : vector<1x8x128xf32>
    %98 = vector.shape_cast %97 : vector<1x8x128xf32> to vector<8x128xf32>
    %99 = arith.truncf %98 : vector<8x128xf32> to vector<8x128xbf16>
    %c0_31 = arith.constant 0 : index
    %c0_32 = arith.constant 0 : index
    %100 = vector.load %arg7[%c0_31, %c0_32] : memref<128x128xbf16, #tpu.memory_space<vmem>>, vector<128x128xbf16>
    %cst_33 = arith.constant dense<0.000000e+00> : vector<8x128xf32>
    %101 = tpu.matmul %99, %100, %cst_33 {dimension_numbers = #tpu.dot_dimension_numbers<[1], [0], [0], [1], [0, 0, 1, 1], [], []>} : vector<8x128xbf16>, vector<128x128xbf16>, vector<8x128xf32> -> vector<8x128xf32>
    %c0_34 = arith.constant 0 : index
    %c0_35 = arith.constant 0 : index
    %102 = vector.load %arg8[%c0_34, %c0_35] : memref<1x128xf32, #tpu.memory_space<vmem>>, vector<1x128xf32>
    %103 = vector.broadcast %102 : vector<1x128xf32> to vector<8x128xf32>
    %104 = arith.addf %101, %103 : vector<8x128xf32>
    %cst_36 = arith.constant 0.000000e+00 : f32
    %105 = vector.broadcast %cst_36 : f32 to vector<8x128xf32>
    %106 = arith.maximumf %104, %105 : vector<8x128xf32>
    %107 = arith.addf %98, %106 : vector<8x128xf32>
    %108 = vector.shape_cast %107 : vector<8x128xf32> to vector<1x8x128xf32>
    %c0_37 = arith.constant 0 : index
    %c0_38 = arith.constant 0 : index
    %c0_39 = arith.constant 0 : index
    %109 = vector.load %arg9[%c0_37, %c0_38, %c0_39] : memref<1x8x128xf32, #tpu.memory_space<vmem>>, vector<1x8x128xf32>
    tpu.vector_store %arg9[%c0_37, %c0_38, %c0_39], %108 {strides = array<i32>} : memref<1x8x128xf32, #tpu.memory_space<vmem>>, vector<1x8x128xf32>,
    return
  }
  func.func @transform_0(%arg0: i32) -> (i32, i32, i32) {
    %c0_i32 = arith.constant 0 : i32
    %c0_i32_0 = arith.constant 0 : i32
    %c0_i32_1 = arith.constant 0 : i32
    return %arg0, %c0_i32, %c0_i32_0 : i32, i32, i32
  }
  func.func @transform_1(%arg0: i32) -> (i32, i32, i32) {
    %c0_i32 = arith.constant 0 : i32
    %c0_i32_0 = arith.constant 0 : i32
    %c0_i32_1 = arith.constant 0 : i32
    return %arg0, %c0_i32, %c0_i32_0 : i32, i32, i32
  }
  func.func @transform_2(%arg0: i32) -> (i32, i32) {
    %c0_i32 = arith.constant 0 : i32
    %c0_i32_0 = arith.constant 0 : i32
    %c0_i32_1 = arith.constant 0 : i32
    return %c0_i32, %c0_i32_0 : i32, i32
  }
  func.func @transform_3(%arg0: i32) -> (i32, i32) {
    %c0_i32 = arith.constant 0 : i32
    %c0_i32_0 = arith.constant 0 : i32
    %c0_i32_1 = arith.constant 0 : i32
    return %c0_i32, %c0_i32_0 : i32, i32
  }
  func.func @transform_4(%arg0: i32) -> (i32, i32) {
    %c0_i32 = arith.constant 0 : i32
    %c0_i32_0 = arith.constant 0 : i32
    %c0_i32_1 = arith.constant 0 : i32
    return %c0_i32, %c0_i32_0 : i32, i32
  }
  func.func @transform_5(%arg0: i32) -> (i32, i32) {
    %c0_i32 = arith.constant 0 : i32
    %c0_i32_0 = arith.constant 0 : i32
    %c0_i32_1 = arith.constant 0 : i32
    return %c0_i32, %c0_i32_0 : i32, i32
  }
  func.func @transform_6(%arg0: i32) -> (i32, i32) {
    %c0_i32 = arith.constant 0 : i32
    %c0_i32_0 = arith.constant 0 : i32
    %c0_i32_1 = arith.constant 0 : i32
    return %c0_i32, %c0_i32_0 : i32, i32
  }
  func.func @transform_7(%arg0: i32) -> (i32, i32) {
    %c0_i32 = arith.constant 0 : i32
    %c0_i32_0 = arith.constant 0 : i32
    %c0_i32_1 = arith.constant 0 : i32
    return %c0_i32, %c0_i32_0 : i32, i32
  }
  func.func @transform_8(%arg0: i32) -> (i32, i32, i32) {
    %c0_i32 = arith.constant 0 : i32
    %c0_i32_0 = arith.constant 0 : i32
    %c0_i32_1 = arith.constant 0 : i32
    return %arg0, %c0_i32, %c0_i32_0 : i32, i32, i32
  }
}

module attributes {stable_mosaic.version = 11 : i64} {
  func.func @_mab_kernel(%arg0: i32, %arg1: memref<1x8x16xbf16, #tpu.memory_space<vmem>>, %arg2: memref<1x8x16xbf16, #tpu.memory_space<vmem>>, %arg3: memref<16x128xbf16, #tpu.memory_space<vmem>>, %arg4: memref<1x128xf32, #tpu.memory_space<vmem>>, %arg5: memref<16x256xbf16, #tpu.memory_space<vmem>>, %arg6: memref<1x256xf32, #tpu.memory_space<vmem>>, %arg7: memref<128x128xbf16, #tpu.memory_space<vmem>>, %arg8: memref<1x128xf32, #tpu.memory_space<vmem>>, %arg9: memref<1x8x128xf32, #tpu.memory_space<vmem>>) attributes {dimension_semantics = [#tpu.dimension_semantics<parallel>], iteration_bounds = array<i64: 2>, scalar_prefetch = 0 : i64, scratch_operands = 0 : i64, tpu.core_type = #tpu.core_type<tc>, window_params = [{transform_indices = @transform_0, window_bounds = array<i64: 1, 8, 16>}, {transform_indices = @transform_1, window_bounds = array<i64: 1, 8, 16>}, {pipeline_mode = #tpu.pipeline_mode<synchronous>, transform_indices = @transform_2, window_bounds = array<i64: 16, 128>}, {pipeline_mode = #tpu.pipeline_mode<synchronous>, transform_indices = @transform_3, window_bounds = array<i64: 1, 128>}, {pipeline_mode = #tpu.pipeline_mode<synchronous>, transform_indices = @transform_4, window_bounds = array<i64: 16, 256>}, {pipeline_mode = #tpu.pipeline_mode<synchronous>, transform_indices = @transform_5, window_bounds = array<i64: 1, 256>}, {pipeline_mode = #tpu.pipeline_mode<synchronous>, transform_indices = @transform_6, window_bounds = array<i64: 128, 128>}, {pipeline_mode = #tpu.pipeline_mode<synchronous>, transform_indices = @transform_7, window_bounds = array<i64: 1, 128>}, {transform_indices = @transform_8, window_bounds = array<i64: 1, 8, 128>}]} {
    %c0 = arith.constant 0 : index
    %c0_0 = arith.constant 0 : index
    %c0_1 = arith.constant 0 : index
    %0 = vector.load %arg1[%c0, %c0_0, %c0_1] : memref<1x8x16xbf16, #tpu.memory_space<vmem>>, vector<1x8x16xbf16>
    %1 = vector.shape_cast %0 : vector<1x8x16xbf16> to vector<8x16xbf16>
    %c0_2 = arith.constant 0 : index
    %c0_3 = arith.constant 0 : index
    %c0_4 = arith.constant 0 : index
    %2 = vector.load %arg2[%c0_2, %c0_3, %c0_4] : memref<1x8x16xbf16, #tpu.memory_space<vmem>>, vector<1x8x16xbf16>
    %3 = vector.shape_cast %2 : vector<1x8x16xbf16> to vector<8x16xbf16>
    %c0_5 = arith.constant 0 : index
    %c0_6 = arith.constant 0 : index
    %4 = vector.load %arg3[%c0_5, %c0_6] : memref<16x128xbf16, #tpu.memory_space<vmem>>, vector<16x128xbf16>
    %cst = arith.constant dense<0.000000e+00> : vector<8x128xf32>
    %5 = tpu.matmul %1, %4, %cst {dimension_numbers = #tpu.dot_dimension_numbers<[1], [0], [0], [1], [0, 0, 1, 1], [], []>} : vector<8x16xbf16>, vector<16x128xbf16>, vector<8x128xf32> -> vector<8x128xf32>
    %c0_7 = arith.constant 0 : index
    %c0_8 = arith.constant 0 : index
    %6 = vector.load %arg4[%c0_7, %c0_8] : memref<1x128xf32, #tpu.memory_space<vmem>>, vector<1x128xf32>
    %7 = vector.broadcast %6 : vector<1x128xf32> to vector<8x128xf32>
    %8 = arith.addf %5, %7 : vector<8x128xf32>
    %c0_9 = arith.constant 0 : index
    %c0_10 = arith.constant 0 : index
    %9 = vector.load %arg5[%c0_9, %c0_10] : memref<16x256xbf16, #tpu.memory_space<vmem>>, vector<16x256xbf16>
    %cst_11 = arith.constant dense<0.000000e+00> : vector<8x256xf32>
    %10 = tpu.matmul %3, %9, %cst_11 {dimension_numbers = #tpu.dot_dimension_numbers<[1], [0], [0], [1], [0, 0, 1, 1], [], []>} : vector<8x16xbf16>, vector<16x256xbf16>, vector<8x256xf32> -> vector<8x256xf32>
    %c0_12 = arith.constant 0 : index
    %c0_13 = arith.constant 0 : index
    %11 = vector.load %arg6[%c0_12, %c0_13] : memref<1x256xf32, #tpu.memory_space<vmem>>, vector<1x256xf32>
    %12 = vector.broadcast %11 : vector<1x256xf32> to vector<8x256xf32>
    %13 = arith.addf %10, %12 : vector<8x256xf32>
    %14 = vector.shape_cast %8 : vector<8x128xf32> to vector<1x8x128xf32>
    %15 = vector.extract_strided_slice %13 {offsets = [0, 0], sizes = [8, 128], strides = [1, 1]} : vector<8x256xf32> to vector<8x128xf32>
    %16 = vector.shape_cast %15 : vector<8x128xf32> to vector<1x8x128xf32>
    %17 = vector.extract_strided_slice %13 {offsets = [0, 128], sizes = [8, 128], strides = [1, 1]} : vector<8x256xf32> to vector<8x128xf32>
    %18 = vector.shape_cast %17 : vector<8x128xf32> to vector<1x8x128xf32>
    %19 = vector.extract_strided_slice %14 {offsets = [0, 0, 0], sizes = [1, 8, 8], strides = [1, 1, 1]} : vector<1x8x128xf32> to vector<1x8x8xf32>
    %20 = arith.truncf %19 : vector<1x8x8xf32> to vector<1x8x8xbf16>
    %21 = vector.extract_strided_slice %16 {offsets = [0, 0, 0], sizes = [1, 8, 8], strides = [1, 1, 1]} : vector<1x8x128xf32> to vector<1x8x8xf32>
    %22 = arith.truncf %21 : vector<1x8x8xf32> to vector<1x8x8xbf16>
    %23 = vector.extract_strided_slice %18 {offsets = [0, 0, 0], sizes = [1, 8, 8], strides = [1, 1, 1]} : vector<1x8x128xf32> to vector<1x8x8xf32>
    %24 = arith.truncf %23 : vector<1x8x8xf32> to vector<1x8x8xbf16>
    "tpu.trace_start"() <{level = 10 : i32, message = "bqd,bkd->bqk"}> : () -> ()
    %cst_14 = arith.constant dense<0.000000e+00> : vector<1x8x8xf32>
    %25 = tpu.matmul %20, %22, %cst_14 {dimension_numbers = #tpu.dot_dimension_numbers<[2], [2], [1], [1], [0, 0, 0, 1, 1, 1], [0], [0]>} : vector<1x8x8xbf16>, vector<1x8x8xbf16>, vector<1x8x8xf32> -> vector<1x8x8xf32>
    "tpu.trace_stop"() : () -> ()
    %cst_15 = arith.constant dense<0xFF800000> : vector<1x8xf32>
    %26 = vector.multi_reduction <maximumf>, %25, %cst_15 [2] : vector<1x8x8xf32> to vector<1x8xf32>
    %27 = vector.shape_cast %26 : vector<1x8xf32> to vector<1x8x1xf32>
    %28 = vector.broadcast %27 : vector<1x8x1xf32> to vector<1x8x8xf32>
    %29 = arith.subf %25, %28 : vector<1x8x8xf32>
    %30 = math.exp %29 : vector<1x8x8xf32>
    %cst_16 = arith.constant dense<0.000000e+00> : vector<1x8xf32>
    %31 = vector.multi_reduction <add>, %30, %cst_16 [2] : vector<1x8x8xf32> to vector<1x8xf32>
    %32 = vector.shape_cast %31 : vector<1x8xf32> to vector<1x8x1xf32>
    %33 = tpu.reciprocal %32 : vector<1x8x1xf32> -> vector<1x8x1xf32>
    %34 = vector.broadcast %33 : vector<1x8x1xf32> to vector<1x8x8xf32>
    %35 = arith.mulf %30, %34 : vector<1x8x8xf32>
    %36 = arith.truncf %35 : vector<1x8x8xf32> to vector<1x8x8xbf16>
    "tpu.trace_start"() <{level = 10 : i32, message = "bqk,bkd->bqd"}> : () -> ()
    %cst_17 = arith.constant dense<0.000000e+00> : vector<1x8x8xf32>
    %37 = tpu.matmul %36, %24, %cst_17 {dimension_numbers = #tpu.dot_dimension_numbers<[2], [1], [1], [2], [0, 0, 0, 1, 1, 2], [0], [0]>} : vector<1x8x8xbf16>, vector<1x8x8xbf16>, vector<1x8x8xf32> -> vector<1x8x8xf32>
    "tpu.trace_stop"() : () -> ()
    %38 = vector.extract_strided_slice %14 {offsets = [0, 0, 8], sizes = [1, 8, 8], strides = [1, 1, 1]} : vector<1x8x128xf32> to vector<1x8x8xf32>
    %39 = arith.truncf %38 : vector<1x8x8xf32> to vector<1x8x8xbf16>
    %40 = vector.extract_strided_slice %16 {offsets = [0, 0, 8], sizes = [1, 8, 8], strides = [1, 1, 1]} : vector<1x8x128xf32> to vector<1x8x8xf32>
    %41 = arith.truncf %40 : vector<1x8x8xf32> to vector<1x8x8xbf16>
    %42 = vector.extract_strided_slice %18 {offsets = [0, 0, 8], sizes = [1, 8, 8], strides = [1, 1, 1]} : vector<1x8x128xf32> to vector<1x8x8xf32>
    %43 = arith.truncf %42 : vector<1x8x8xf32> to vector<1x8x8xbf16>
    "tpu.trace_start"() <{level = 10 : i32, message = "bqd,bkd->bqk"}> : () -> ()
    %cst_18 = arith.constant dense<0.000000e+00> : vector<1x8x8xf32>
    %44 = tpu.matmul %39, %41, %cst_18 {dimension_numbers = #tpu.dot_dimension_numbers<[2], [2], [1], [1], [0, 0, 0, 1, 1, 1], [0], [0]>} : vector<1x8x8xbf16>, vector<1x8x8xbf16>, vector<1x8x8xf32> -> vector<1x8x8xf32>
    "tpu.trace_stop"() : () -> ()
    %cst_19 = arith.constant dense<0xFF800000> : vector<1x8xf32>
    %45 = vector.multi_reduction <maximumf>, %44, %cst_19 [2] : vector<1x8x8xf32> to vector<1x8xf32>
    %46 = vector.shape_cast %45 : vector<1x8xf32> to vector<1x8x1xf32>
    %47 = vector.broadcast %46 : vector<1x8x1xf32> to vector<1x8x8xf32>
    %48 = arith.subf %44, %47 : vector<1x8x8xf32>
    %49 = math.exp %48 : vector<1x8x8xf32>
    %cst_20 = arith.constant dense<0.000000e+00> : vector<1x8xf32>
    %50 = vector.multi_reduction <add>, %49, %cst_20 [2] : vector<1x8x8xf32> to vector<1x8xf32>
    %51 = vector.shape_cast %50 : vector<1x8xf32> to vector<1x8x1xf32>
    %52 = tpu.reciprocal %51 : vector<1x8x1xf32> -> vector<1x8x1xf32>
    %53 = vector.broadcast %52 : vector<1x8x1xf32> to vector<1x8x8xf32>
    %54 = arith.mulf %49, %53 : vector<1x8x8xf32>
    %55 = arith.truncf %54 : vector<1x8x8xf32> to vector<1x8x8xbf16>
    "tpu.trace_start"() <{level = 10 : i32, message = "bqk,bkd->bqd"}> : () -> ()
    %cst_21 = arith.constant dense<0.000000e+00> : vector<1x8x8xf32>
    %56 = tpu.matmul %55, %43, %cst_21 {dimension_numbers = #tpu.dot_dimension_numbers<[2], [1], [1], [2], [0, 0, 0, 1, 1, 2], [0], [0]>} : vector<1x8x8xbf16>, vector<1x8x8xbf16>, vector<1x8x8xf32> -> vector<1x8x8xf32>
    "tpu.trace_stop"() : () -> ()
    %57 = vector.extract_strided_slice %14 {offsets = [0, 0, 16], sizes = [1, 8, 8], strides = [1, 1, 1]} : vector<1x8x128xf32> to vector<1x8x8xf32>
    %58 = arith.truncf %57 : vector<1x8x8xf32> to vector<1x8x8xbf16>
    %59 = vector.extract_strided_slice %16 {offsets = [0, 0, 16], sizes = [1, 8, 8], strides = [1, 1, 1]} : vector<1x8x128xf32> to vector<1x8x8xf32>
    %60 = arith.truncf %59 : vector<1x8x8xf32> to vector<1x8x8xbf16>
    %61 = vector.extract_strided_slice %18 {offsets = [0, 0, 16], sizes = [1, 8, 8], strides = [1, 1, 1]} : vector<1x8x128xf32> to vector<1x8x8xf32>
    %62 = arith.truncf %61 : vector<1x8x8xf32> to vector<1x8x8xbf16>
    "tpu.trace_start"() <{level = 10 : i32, message = "bqd,bkd->bqk"}> : () -> ()
    %cst_22 = arith.constant dense<0.000000e+00> : vector<1x8x8xf32>
    %63 = tpu.matmul %58, %60, %cst_22 {dimension_numbers = #tpu.dot_dimension_numbers<[2], [2], [1], [1], [0, 0, 0, 1, 1, 1], [0], [0]>} : vector<1x8x8xbf16>, vector<1x8x8xbf16>, vector<1x8x8xf32> -> vector<1x8x8xf32>
    "tpu.trace_stop"() : () -> ()
    %cst_23 = arith.constant dense<0xFF800000> : vector<1x8xf32>
    %64 = vector.multi_reduction <maximumf>, %63, %cst_23 [2] : vector<1x8x8xf32> to vector<1x8xf32>
    %65 = vector.shape_cast %64 : vector<1x8xf32> to vector<1x8x1xf32>
    %66 = vector.broadcast %65 : vector<1x8x1xf32> to vector<1x8x8xf32>
    %67 = arith.subf %63, %66 : vector<1x8x8xf32>
    %68 = math.exp %67 : vector<1x8x8xf32>
    %cst_24 = arith.constant dense<0.000000e+00> : vector<1x8xf32>
    %69 = vector.multi_reduction <add>, %68, %cst_24 [2] : vector<1x8x8xf32> to vector<1x8xf32>
    %70 = vector.shape_cast %69 : vector<1x8xf32> to vector<1x8x1xf32>
    %71 = tpu.reciprocal %70 : vector<1x8x1xf32> -> vector<1x8x1xf32>
    %72 = vector.broadcast %71 : vector<1x8x1xf32> to vector<1x8x8xf32>
    %73 = arith.mulf %68, %72 : vector<1x8x8xf32>
    %74 = arith.truncf %73 : vector<1x8x8xf32> to vector<1x8x8xbf16>
    "tpu.trace_start"() <{level = 10 : i32, message = "bqk,bkd->bqd"}> : () -> ()
    %cst_25 = arith.constant dense<0.000000e+00> : vector<1x8x8xf32>
    %75 = tpu.matmul %74, %62, %cst_25 {dimension_numbers = #tpu.dot_dimension_numbers<[2], [1], [1], [2], [0, 0, 0, 1, 1, 2], [0], [0]>} : vector<1x8x8xbf16>, vector<1x8x8xbf16>, vector<1x8x8xf32> -> vector<1x8x8xf32>
    "tpu.trace_stop"() : () -> ()
    %76 = vector.extract_strided_slice %14 {offsets = [0, 0, 24], sizes = [1, 8, 8], strides = [1, 1, 1]} : vector<1x8x128xf32> to vector<1x8x8xf32>
    %77 = arith.truncf %76 : vector<1x8x8xf32> to vector<1x8x8xbf16>
    %78 = vector.extract_strided_slice %16 {offsets = [0, 0, 24], sizes = [1, 8, 8], strides = [1, 1, 1]} : vector<1x8x128xf32> to vector<1x8x8xf32>
    %79 = arith.truncf %78 : vector<1x8x8xf32> to vector<1x8x8xbf16>
    %80 = vector.extract_strided_slice %18 {offsets = [0, 0, 24], sizes = [1, 8, 8], strides = [1, 1, 1]} : vector<1x8x128xf32> to vector<1x8x8xf32>
    %81 = arith.truncf %80 : vector<1x8x8xf32> to vector<1x8x8xbf16>
    "tpu.trace_start"() <{level = 10 : i32, message = "bqd,bkd->bqk"}> : () -> ()
    %cst_26 = arith.constant dense<0.000000e+00> : vector<1x8x8xf32>
    %82 = tpu.matmul %77, %79, %cst_26 {dimension_numbers = #tpu.dot_dimension_numbers<[2], [2], [1], [1], [0, 0, 0, 1, 1, 1], [0], [0]>} : vector<1x8x8xbf16>, vector<1x8x8xbf16>, vector<1x8x8xf32> -> vector<1x8x8xf32>
    "tpu.trace_stop"() : () -> ()
    %cst_27 = arith.constant dense<0xFF800000> : vector<1x8xf32>
    %83 = vector.multi_reduction <maximumf>, %82, %cst_27 [2] : vector<1x8x8xf32> to vector<1x8xf32>
    %84 = vector.shape_cast %83 : vector<1x8xf32> to vector<1x8x1xf32>
    %85 = vector.broadcast %84 : vector<1x8x1xf32> to vector<1x8x8xf32>
    %86 = arith.subf %82, %85 : vector<1x8x8xf32>
    %87 = math.exp %86 : vector<1x8x8xf32>
    %cst_28 = arith.constant dense<0.000000e+00> : vector<1x8xf32>
    %88 = vector.multi_reduction <add>, %87, %cst_28 [2] : vector<1x8x8xf32> to vector<1x8xf32>
    %89 = vector.shape_cast %88 : vector<1x8xf32> to vector<1x8x1xf32>
    %90 = tpu.reciprocal %89 : vector<1x8x1xf32> -> vector<1x8x1xf32>
    %91 = vector.broadcast %90 : vector<1x8x1xf32> to vector<1x8x8xf32>
    %92 = arith.mulf %87, %91 : vector<1x8x8xf32>
    %93 = arith.truncf %92 : vector<1x8x8xf32> to vector<1x8x8xbf16>
    "tpu.trace_start"() <{level = 10 : i32, message = "bqk,bkd->bqd"}> : () -> ()
    %cst_29 = arith.constant dense<0.000000e+00> : vector<1x8x8xf32>
    %94 = tpu.matmul %93, %81, %cst_29 {dimension_numbers = #tpu.dot_dimension_numbers<[2], [1], [1], [2], [0, 0, 0, 1, 1, 2], [0], [0]>} : vector<1x8x8xbf16>, vector<1x8x8xbf16>, vector<1x8x8xf32> -> vector<1x8x8xf32>
    %cst_30 = arith.constant 0.000000e+00 : f32
    "tpu.trace_stop"() : () -> ()
    %95 = vector.broadcast %cst_30 : f32 to vector<1x8x96xf32>
    %96 = tpu.concatenate %37, %56, %75, %94, %95 in 2 : vector<1x8x8xf32>, vector<1x8x8xf32>, vector<1x8x8xf32>, vector<1x8x8xf32>, vector<1x8x96xf32> -> vector<1x8x128xf32>
    %97 = arith.addf %14, %96 : vector<1x8x128xf32>
    %98 = vector.shape_cast %97 : vector<1x8x128xf32> to vector<8x128xf32>
    %99 = arith.truncf %98 : vector<8x128xf32> to vector<8x128xbf16>
    %c0_31 = arith.constant 0 : index
    %c0_32 = arith.constant 0 : index
    %100 = vector.load %arg7[%c0_31, %c0_32] : memref<128x128xbf16, #tpu.memory_space<vmem>>, vector<128x128xbf16>
    %cst_33 = arith.constant dense<0.000000e+00> : vector<8x128xf32>
    %101 = tpu.matmul %99, %100, %cst_33 {dimension_numbers = #tpu.dot_dimension_numbers<[1], [0], [0], [1], [0, 0, 1, 1], [], []>} : vector<8x128xbf16>, vector<128x128xbf16>, vector<8x128xf32> -> vector<8x128xf32>
    %c0_34 = arith.constant 0 : index
    %c0_35 = arith.constant 0 : index
    %102 = vector.load %arg8[%c0_34, %c0_35] : memref<1x128xf32, #tpu.memory_space<vmem>>, vector<1x128xf32>
    %103 = vector.broadcast %102 : vector<1x128xf32> to vector<8x128xf32>
    %104 = arith.addf %101, %103 : vector<8x128xf32>
    %cst_36 = arith.constant 0.000000e+00 : f32
    %105 = vector.broadcast %cst_36 : f32 to vector<8x128xf32>
    %106 = arith.maximumf %104, %105 : vector<8x128xf32>
    %107 = arith.addf %98, %106 : vector<8x128xf32>
    %108 = vector.shape_cast %107 : vector<8x128xf32> to vector<1x8x128xf32>
    %c0_37 = arith.constant 0 : index
    %c0_38 = arith.constant 0 : index
    %c0_39 = arith.constant 0 : index
    %109 = vector.load %arg9[%c0_37, %c0_38, %c0_39] : memref<1x8x128xf32, #tpu.memory_space<vmem>>, vector<1x8x128xf32>
    tpu.vector_store %arg9[%c0_37, %c0_38, %c0_39], %108 {strides = array<i32>} : memref<1x8x128xf32, #tpu.memory_space<vmem>>, vector<1x8x128xf32>,
    return
  }
  func.func @transform_0(%arg0: i32) -> (i32, i32, i32) {
    %c0_i32 = arith.constant 0 : i32
    %c0_i32_0 = arith.constant 0 : i32
    %c0_i32_1 = arith.constant 0 : i32
    return %arg0, %c0_i32, %c0_i32_0 : i32, i32, i32
  }
  func.func @transform_1(%arg0: i32) -> (i32, i32, i32) {
    %c0_i32 = arith.constant 0 : i32
    %c0_i32_0 = arith.constant 0 : i32
    %c0_i32_1 = arith.constant 0 : i32
    return %arg0, %c0_i32, %c0_i32_0 : i32, i32, i32
  }
  func.func @transform_2(%arg0: i32) -> (i32, i32) {
    %c0_i32 = arith.constant 0 : i32
    %c0_i32_0 = arith.constant 0 : i32
    %c0_i32_1 = arith.constant 0 : i32
    return %c0_i32, %c0_i32_0 : i32, i32
  }
  func.func @transform_3(%arg0: i32) -> (i32, i32) {
    %c0_i32 = arith.constant 0 : i32
    %c0_i32_0 = arith.constant 0 : i32
    %c0_i32_1 = arith.constant 0 : i32
    return %c0_i32, %c0_i32_0 : i32, i32
  }
  func.func @transform_4(%arg0: i32) -> (i32, i32) {
    %c0_i32 = arith.constant 0 : i32
    %c0_i32_0 = arith.constant 0 : i32
    %c0_i32_1 = arith.constant 0 : i32
    return %c0_i32, %c0_i32_0 : i32, i32
  }
  func.func @transform_5(%arg0: i32) -> (i32, i32) {
    %c0_i32 = arith.constant 0 : i32
    %c0_i32_0 = arith.constant 0 : i32
    %c0_i32_1 = arith.constant 0 : i32
    return %c0_i32, %c0_i32_0 : i32, i32
  }
  func.func @transform_6(%arg0: i32) -> (i32, i32) {
    %c0_i32 = arith.constant 0 : i32
    %c0_i32_0 = arith.constant 0 : i32
    %c0_i32_1 = arith.constant 0 : i32
    return %c0_i32, %c0_i32_0 : i32, i32
  }
  func.func @transform_7(%arg0: i32) -> (i32, i32) {
    %c0_i32 = arith.constant 0 : i32
    %c0_i32_0 = arith.constant 0 : i32
    %c0_i32_1 = arith.constant 0 : i32
    return %c0_i32, %c0_i32_0 : i32, i32
  }
  func.func @transform_8(%arg0: i32) -> (i32, i32, i32) {
    %c0_i32 = arith.constant 0 : i32
    %c0_i32_0 = arith.constant 0 : i32
    %c0_i32_1 = arith.constant 0 : i32
    return %arg0, %c0_i32, %c0_i32_0 : i32, i32, i32
  }
}

</mosaic_0001>

<llo_original>
// kernel: tpu_custom_call.1
$region0: #{tpu_custom_call.1}
  #allocation0 [shape = 'u32[]', space=smem, size = 0x4, offset = 0x4, fixed_abs, tag = 'smem constant byte address 0x4 - core index']
  #allocation1 [shape = 'u32[72,128]{1,0:T(1,128)}', space=vmem, size = 0x9000, scoped, tag = 'internal scratch']
  %s0 = inlined_call_operand.hbm [shape: bf16[2,8,16], index: 0, kind: input, shape index: {}]
  %s1 = inlined_call_operand.hbm [shape: bf16[2,8,16], index: 1, kind: input, shape index: {}]
  %s2 = inlined_call_operand.hbm [shape: bf16[16,128], index: 2, kind: input, shape index: {}]
  %s3 = inlined_call_operand.vmem [shape: f32[1,128], index: 3, kind: input, shape index: {}]
  %s4 = inlined_call_operand.hbm [shape: bf16[16,256], index: 4, kind: input, shape index: {}]
  %s5 = inlined_call_operand.vmem [shape: f32[1,256], index: 5, kind: input, shape index: {}]
  %s6 = inlined_call_operand.hbm [shape: bf16[128,128], index: 6, kind: input, shape index: {}]
  %s7 = inlined_call_operand.vmem [shape: f32[1,128], index: 7, kind: input, shape index: {}]
  %s8 = inlined_call_operand.hbm [shape: f32[2,8,128], index: 8, kind: output, shape index: {}]
  %s9 = sld [smem:[#allocation0]]
  $region85: #{tpu_custom_call.1} parent=0
    _
  %s11 = ssub.s32 1, %s9
  %s12 = scalar_select 0, %s11, %s9
  $region1: #{tpu_custom_call.1} parent=0
    #allocation2 [shape = 'u8[4096]{0}', space=vmem, size = 0x1000, scoped, tag = 'input window, operand 0']
    #allocation3 [shape = 's32[2]{0}', space=sflag, size = 0x8, scoped, tag = 'scoped memory for tpu_custom_call.1']
    #allocation4 [shape = 's32[2]{0}', space=sflag, size = 0x8, scoped, tag = 'scoped memory for tpu_custom_call.1']
    #allocation5 [shape = 'u8[4096]{0}', space=vmem, size = 0x1000, scoped, tag = 'input window, operand 1']
    #allocation6 [shape = 's32[2]{0}', space=sflag, size = 0x8, scoped, tag = 'scoped memory for tpu_custom_call.1']
    #allocation7 [shape = 'u8[4096]{0}', space=vmem, size = 0x1000, scoped, tag = 'input window, operand 2, single buffered']
    #allocation8 [shape = 'u8[8192]{0}', space=vmem, size = 0x2000, scoped, tag = 'input window, operand 4, single buffered']
    #allocation9 [shape = 's32[1]{0}', space=sflag, size = 0x4, scoped, tag = 'scoped memory for tpu_custom_call.1']
    #allocation10 [shape = 'u8[32768]{0}', space=vmem, size = 0x8000, scoped, tag = 'input window, operand 6, single buffered']
    #allocation11 [shape = 'u8[8192]{0}', space=vmem, size = 0x2000, scoped, tag = 'output window, operand 0']
    %13 = vsyncpa [#allocation3], 0
    %s14 = scalar_lea.sflag [#allocation3], 1
    %15 = vsyncpa %s14, 0
    %16 = vsyncpa [#allocation6], 0
    %s17 = scalar_lea.sflag [#allocation6], 1
    %18 = vsyncpa %s17, 0
    %19 = vsyncpa [#allocation9], 0
    %20 = vsyncpa [#allocation4], 0
    %s21 = scalar_lea.sflag [#allocation4], 1
    %22 = vsyncpa %s21, 0
    loop: start=0, step=1, limit=4
    $region2: #{tpu_custom_call.1} parent=1 // loop_pre_header
      _
    $region3: #{tpu_custom_call.1} parent=1 // loop_header
      %s24 = sphi 0, %s28
      %p25 = scmp.ge.s32.totalorder %s24, 4
      %s34 = sphi 0, %s36
      %s37 = sphi 0, %s34
      %s38 = sphi 0, %s37
      %s54 = sphi 0, %s38
      %s60 = sphi 0, %s62
      %s63 = sphi 0, %s60
      %s64 = sphi 0, %s63
      %s80 = sphi 0, %s64
      %s84 = sphi 0, %s84
      %s86 = sphi 0, %s84
      %s87 = sphi 0, %s86
      %s101 = sphi 0, %s87
      %s105 = sphi 0, %s105
      %s107 = sphi 0, %s105
      %s108 = sphi 0, %s107
      %s122 = sphi 0, %s108
      %s126 = sphi 0, %s126
      %s128 = sphi 0, %s126
      %s129 = sphi 0, %s128
      %s143 = sphi 0, %s129
      %s147 = sphi 0, %s147
      %s149 = sphi 0, %s147
      %s150 = sphi 0, %s149
      %s164 = sphi 0, %s150
      %s168 = sphi 0, %s168
      %s170 = sphi 0, %s168
      %s171 = sphi 0, %s170
      %s185 = sphi 0, %s171
      %s189 = sphi 0, %s189
      %s191 = sphi 0, %s189
      %s192 = sphi 0, %s191
      %s206 = sphi 0, %s192
      %s212 = sphi 0, %s214
      %s215 = sphi 0, %s212
      %s216 = sphi 0, %s215
      %s232 = sphi 0, %s216
    $region4: #{tpu_custom_call.1} parent=1 // loop_header_branch
      %27 = sbr.rel (%p25) target = $region8
    $region5: #{tpu_custom_call.1} parent=1 // loop_body
      %s29 = ssub.s32 %s24, 1
      %s30 = ssub.s32 %s24, 2
      %s31 = sadd.s32 %s24, 1
      %s32 = ssub.s32 %s24, %s31
      %p33 = scmp.eq.s32.totalorder %s32, 0
      %s35 = sadd.s32 %s34, 1
      %s36 = scalar_select %p33, %s34, %s35
      %p39 = pneg %p33
      %p40 = scmp.eq.s32.totalorder %s24, 1
      %p41 = por %p39, %p40
      %p42 = scmp.ne.s32.totalorder %s34, %s37
      %p43 = scmp.eq.s32.totalorder %s24, 0
      %p44 = por %p42, %p43
      %p45 = scmp.ne.s32.totalorder %s34, %s37
      %p46 = scmp.eq.s32.totalorder %s29, 1
      %p47 = por %p45, %p46
      %p48 = scmp.ne.s32.totalorder %s37, %s38
      %p49 = scmp.eq.s32.totalorder %s29, 0
      %p50 = por %p48, %p49
      %p51 = scmp.ne.s32.totalorder %s37, %s38
      %p52 = scmp.eq.s32.totalorder %s30, 1
      %p53 = por %p51, %p52
      %p55 = scmp.ne.s32.totalorder %s38, %s54
      %p56 = scmp.eq.s32.totalorder %s30, 0
      %p57 = por %p55, %p56
      %s58 = ssub.s32 %s24, %s31
      %p59 = scmp.eq.s32.totalorder %s58, 0
      %s61 = sadd.s32 %s60, 1
      %s62 = scalar_select %p59, %s60, %s61
      %p65 = pneg %p59
      %p66 = scmp.eq.s32.totalorder %s24, 1
      %p67 = por %p65, %p66
      %p68 = scmp.ne.s32.totalorder %s60, %s63
      %p69 = scmp.eq.s32.totalorder %s24, 0
      %p70 = por %p68, %p69
      %p71 = scmp.ne.s32.totalorder %s60, %s63
      %p72 = scmp.eq.s32.totalorder %s29, 1
      %p73 = por %p71, %p72
      %p74 = scmp.ne.s32.totalorder %s63, %s64
      %p75 = scmp.eq.s32.totalorder %s29, 0
      %p76 = por %p74, %p75
      %p77 = scmp.ne.s32.totalorder %s63, %s64
      %p78 = scmp.eq.s32.totalorder %s30, 1
      %p79 = por %p77, %p78
      %p81 = scmp.ne.s32.totalorder %s64, %s80
      %p82 = scmp.eq.s32.totalorder %s30, 0
      %p83 = por %p81, %p82
      %s85 = sadd.s32 %s84, 1
      %p88 = scmp.eq.s32.totalorder %s24, 1
      %p89 = scmp.ne.s32.totalorder %s84, %s86
      %p90 = scmp.eq.s32.totalorder %s24, 0
      %p91 = por %p89, %p90
      %p92 = scmp.ne.s32.totalorder %s84, %s86
      %p93 = scmp.eq.s32.totalorder %s29, 1
      %p94 = por %p92, %p93
      %p95 = scmp.ne.s32.totalorder %s86, %s87
      %p96 = scmp.eq.s32.totalorder %s29, 0
      %p97 = por %p95, %p96
      %p98 = scmp.ne.s32.totalorder %s86, %s87
      %p99 = scmp.eq.s32.totalorder %s30, 1
      %p100 = por %p98, %p99
      %p102 = scmp.ne.s32.totalorder %s87, %s101
      %p103 = scmp.eq.s32.totalorder %s30, 0
      %p104 = por %p102, %p103
      %s106 = sadd.s32 %s105, 1
      %p109 = scmp.eq.s32.totalorder %s24, 1
      %p110 = scmp.ne.s32.totalorder %s105, %s107
      %p111 = scmp.eq.s32.totalorder %s24, 0
      %p112 = por %p110, %p111
      %p113 = scmp.ne.s32.totalorder %s105, %s107
      %p114 = scmp.eq.s32.totalorder %s29, 1
      %p115 = por %p113, %p114
      %p116 = scmp.ne.s32.totalorder %s107, %s108
      %p117 = scmp.eq.s32.totalorder %s29, 0
      %p118 = por %p116, %p117
      %p119 = scmp.ne.s32.totalorder %s107, %s108
      %p120 = scmp.eq.s32.totalorder %s30, 1
      %p121 = por %p119, %p120
      %p123 = scmp.ne.s32.totalorder %s108, %s122
      %p124 = scmp.eq.s32.totalorder %s30, 0
      %p125 = por %p123, %p124
      %s127 = sadd.s32 %s126, 1
      %p130 = scmp.eq.s32.totalorder %s24, 1
      %p131 = scmp.ne.s32.totalorder %s126, %s128
      %p132 = scmp.eq.s32.totalorder %s24, 0
      %p133 = por %p131, %p132
      %p134 = scmp.ne.s32.totalorder %s126, %s128
      %p135 = scmp.eq.s32.totalorder %s29, 1
      %p136 = por %p134, %p135
      %p137 = scmp.ne.s32.totalorder %s128, %s129
      %p138 = scmp.eq.s32.totalorder %s29, 0
      %p139 = por %p137, %p138
      %p140 = scmp.ne.s32.totalorder %s128, %s129
      %p141 = scmp.eq.s32.totalorder %s30, 1
      %p142 = por %p140, %p141
      %p144 = scmp.ne.s32.totalorder %s129, %s143
      %p145 = scmp.eq.s32.totalorder %s30, 0
      %p146 = por %p144, %p145
      %s148 = sadd.s32 %s147, 1
      %p151 = scmp.eq.s32.totalorder %s24, 1
      %p152 = scmp.ne.s32.totalorder %s147, %s149
      %p153 = scmp.eq.s32.totalorder %s24, 0
      %p154 = por %p152, %p153
      %p155 = scmp.ne.s32.totalorder %s147, %s149
      %p156 = scmp.eq.s32.totalorder %s29, 1
      %p157 = por %p155, %p156
      %p158 = scmp.ne.s32.totalorder %s149, %s150
      %p159 = scmp.eq.s32.totalorder %s29, 0
      %p160 = por %p158, %p159
      %p161 = scmp.ne.s32.totalorder %s149, %s150
      %p162 = scmp.eq.s32.totalorder %s30, 1
      %p163 = por %p161, %p162
      %p165 = scmp.ne.s32.totalorder %s150, %s164
      %p166 = scmp.eq.s32.totalorder %s30, 0
      %p167 = por %p165, %p166
      %s169 = sadd.s32 %s168, 1
      %p172 = scmp.eq.s32.totalorder %s24, 1
      %p173 = scmp.ne.s32.totalorder %s168, %s170
      %p174 = scmp.eq.s32.totalorder %s24, 0
      %p175 = por %p173, %p174
      %p176 = scmp.ne.s32.totalorder %s168, %s170
      %p177 = scmp.eq.s32.totalorder %s29, 1
      %p178 = por %p176, %p177
      %p179 = scmp.ne.s32.totalorder %s170, %s171
      %p180 = scmp.eq.s32.totalorder %s29, 0
      %p181 = por %p179, %p180
      %p182 = scmp.ne.s32.totalorder %s170, %s171
      %p183 = scmp.eq.s32.totalorder %s30, 1
      %p184 = por %p182, %p183
      %p186 = scmp.ne.s32.totalorder %s171, %s185
      %p187 = scmp.eq.s32.totalorder %s30, 0
      %p188 = por %p186, %p187
      %s190 = sadd.s32 %s189, 1
      %p193 = scmp.eq.s32.totalorder %s24, 1
      %p194 = scmp.ne.s32.totalorder %s189, %s191
      %p195 = scmp.eq.s32.totalorder %s24, 0
      %p196 = por %p194, %p195
      %p197 = scmp.ne.s32.totalorder %s189, %s191
      %p198 = scmp.eq.s32.totalorder %s29, 1
      %p199 = por %p197, %p198
      %p200 = scmp.ne.s32.totalorder %s191, %s192
      %p201 = scmp.eq.s32.totalorder %s29, 0
      %p202 = por %p200, %p201
      %p203 = scmp.ne.s32.totalorder %s191, %s192
      %p204 = scmp.eq.s32.totalorder %s30, 1
      %p205 = por %p203, %p204
      %p207 = scmp.ne.s32.totalorder %s192, %s206
      %p208 = scmp.eq.s32.totalorder %s30, 0
      %p209 = por %p207, %p208
      %s210 = ssub.s32 %s24, %s31
      %p211 = scmp.eq.s32.totalorder %s210, 0
      %s213 = sadd.s32 %s212, 1
      %s214 = scalar_select %p211, %s212, %s213
      %p217 = pneg %p211
      %p218 = scmp.eq.s32.totalorder %s24, 1
      %p219 = por %p217, %p218
      %p220 = scmp.ne.s32.totalorder %s212, %s215
      %p221 = scmp.eq.s32.totalorder %s24, 0
      %p222 = por %p220, %p221
      %p223 = scmp.ne.s32.totalorder %s212, %s215
      %p224 = scmp.eq.s32.totalorder %s29, 1
      %p225 = por %p223, %p224
      %p226 = scmp.ne.s32.totalorder %s215, %s216
      %p227 = scmp.eq.s32.totalorder %s29, 0
      %p228 = por %p226, %p227
      %p229 = scmp.ne.s32.totalorder %s215, %s216
      %p230 = scmp.eq.s32.totalorder %s30, 1
      %p231 = por %p229, %p230
      %p233 = scmp.ne.s32.totalorder %s216, %s232
      %p234 = scmp.eq.s32.totalorder %s30, 0
      %p235 = por %p233, %p234
      %p236 = scmp.le.s32.totalorder 1, %s24
      %p237 = scmp.lt.s32.totalorder %s24, 3
      %p238 = pnand %p236, %p237
      %p239 = pneg %p238
      // Predicated region
      $region9: #{tpu_custom_call.1} parent=5 // pred_check
        _
      $region10: #{tpu_custom_call.1} parent=5 // pred_check_branch
        %241 = sbr.rel (%p238) target = $region12
      $region11: #{tpu_custom_call.1} parent=5 // pred_region
        %s242 = ssub.s32 %s24, 1
        // Predicated region
        $region13: #{tpu_custom_call.1} parent=11 // pred_check
          %p243 = pneg %p97
        $region14: #{tpu_custom_call.1} parent=11 // pred_check_branch
          %245 = sbr.rel (%p243) target = $region16
        $region15: #{tpu_custom_call.1} parent=11 // pred_region
          %247 = vsyncadd [#allocation6], 0
          %s248 = sshll.u32 %s2, 4
          %s249 = int_to_ptr.hbm [resolvable:$true] %s248
          %s250 = sshll.u32 [#allocation7], 4
          %s251 = int_to_ptr.vmem [resolvable:$true] %s250
          %256 = dma.hbm_to_vmem [thread:$0]  %s249, 128, %s251, [#allocation6], 64, 64, 4
        $region16: #{tpu_custom_call.1} parent=11 // pred_fallthru
          _
        // Predicated region
        $region17: #{tpu_custom_call.1} parent=11 // pred_check
          %p257 = pneg %p118
        $region18: #{tpu_custom_call.1} parent=11 // pred_check_branch
          %259 = sbr.rel (%p257) target = $region20
        $region19: #{tpu_custom_call.1} parent=11 // pred_region
          _
        $region20: #{tpu_custom_call.1} parent=11 // pred_fallthru
          _
        // Predicated region
        $region21: #{tpu_custom_call.1} parent=11 // pred_check
          %p260 = pneg %p139
        $region22: #{tpu_custom_call.1} parent=11 // pred_check_branch
          %262 = sbr.rel (%p260) target = $region24
        $region23: #{tpu_custom_call.1} parent=11 // pred_region
          %264 = vsyncadd [#allocation9], 0
          %s265 = sshll.u32 %s4, 4
          %s266 = int_to_ptr.hbm [resolvable:$true] %s265
          %s267 = sshll.u32 [#allocation8], 4
          %s268 = int_to_ptr.vmem [resolvable:$true] %s267
          %273 = dma.hbm_to_vmem [thread:$0]  %s266, 256, %s268, [#allocation9], 128, 128, 8
        $region24: #{tpu_custom_call.1} parent=11 // pred_fallthru
          _
        // Predicated region
        $region25: #{tpu_custom_call.1} parent=11 // pred_check
          %p274 = pneg %p160
        $region26: #{tpu_custom_call.1} parent=11 // pred_check_branch
          %276 = sbr.rel (%p274) target = $region28
        $region27: #{tpu_custom_call.1} parent=11 // pred_region
          _
        $region28: #{tpu_custom_call.1} parent=11 // pred_fallthru
          _
        // Predicated region
        $region29: #{tpu_custom_call.1} parent=11 // pred_check
          %p277 = pneg %p181
        $region30: #{tpu_custom_call.1} parent=11 // pred_check_branch
          %279 = sbr.rel (%p277) target = $region32
        $region31: #{tpu_custom_call.1} parent=11 // pred_region
          %281 = vsyncadd [#allocation9], 0
          %s282 = sshll.u32 %s6, 4
          %s283 = int_to_ptr.hbm [resolvable:$true] %s282
          %s284 = sshll.u32 [#allocation10], 4
          %s285 = int_to_ptr.vmem [resolvable:$true] %s284
          %290 = dma.hbm_to_vmem [thread:$0]  %s283, 1024, %s285, [#allocation9], 64, 64, 4
        $region32: #{tpu_custom_call.1} parent=11 // pred_fallthru
          _
        // Predicated region
        $region33: #{tpu_custom_call.1} parent=11 // pred_check
          %p291 = pneg %p202
        $region34: #{tpu_custom_call.1} parent=11 // pred_check_branch
          %293 = sbr.rel (%p291) target = $region36
        $region35: #{tpu_custom_call.1} parent=11 // pred_region
          _
        $region36: #{tpu_custom_call.1} parent=11 // pred_fallthru
          _
      $region12: #{tpu_custom_call.1} parent=5 // pred_fallthru
        _
      %p294 = scmp.lt.s32.totalorder %s24, 2
      // Predicated region
      $region37: #{tpu_custom_call.1} parent=5 // pred_check
        %p295 = pneg %p294
      $region38: #{tpu_custom_call.1} parent=5 // pred_check_branch
        %297 = sbr.rel (%p295) target = $region40
      $region39: #{tpu_custom_call.1} parent=5 // pred_region
        // Predicated region
        $region41: #{tpu_custom_call.1} parent=39 // pred_check
          %p298 = pneg %p44
        $region42: #{tpu_custom_call.1} parent=39 // pred_check_branch
          %300 = sbr.rel (%p298) target = $region44
        $region43: #{tpu_custom_call.1} parent=39 // pred_region
          %s301 = sand.u32 %s34, 1
          %s302 = scalar_lea.sflag [#allocation3], %s301
          %s303 = sand.u32 %s34, 1
          %s304 = smul.addr %s303, 4
          %s305 = scalar_lea.vmem [#allocation2], %s304
          %307 = vsyncadd %s302, 0
          %s308 = smul.addr %s24, 4
          %s309 = scalar_lea.hbm %s0, %s308
          %s311 = sshll.u32 %s309, 4
          %s312 = int_to_ptr.hbm [resolvable:$true] %s311
          %s313 = sshll.u32 %s305, 4
          %s314 = int_to_ptr.vmem [resolvable:$true] %s313
          %316 = dma.hbm_to_vmem [thread:$0]  %s312, 64, %s314, %s302
        $region44: #{tpu_custom_call.1} parent=39 // pred_fallthru
          _
        // Predicated region
        $region45: #{tpu_custom_call.1} parent=39 // pred_check
          %p317 = pneg %p70
        $region46: #{tpu_custom_call.1} parent=39 // pred_check_branch
          %319 = sbr.rel (%p317) target = $region48
        $region47: #{tpu_custom_call.1} parent=39 // pred_region
          %s320 = sand.u32 %s24, 1
          %s321 = scalar_lea.sflag [#allocation6], %s320
          %s322 = sand.u32 %s60, 1
          %s323 = smul.addr %s322, 4
          %s324 = scalar_lea.vmem [#allocation5], %s323
          %326 = vsyncadd %s321, 0
          %s327 = smul.addr %s24, 4
          %s328 = scalar_lea.hbm %s1, %s327
          %s330 = sshll.u32 %s328, 4
          %s331 = int_to_ptr.hbm [resolvable:$true] %s330
          %s332 = sshll.u32 %s324, 4
          %s333 = int_to_ptr.vmem [resolvable:$true] %s332
          %335 = dma.hbm_to_vmem [thread:$0]  %s331, 64, %s333, %s321
        $region48: #{tpu_custom_call.1} parent=39 // pred_fallthru
          _
      $region40: #{tpu_custom_call.1} parent=5 // pred_fallthru
        _
      %p336 = scmp.le.s32.totalorder 1, %s24
      %p337 = scmp.lt.s32.totalorder %s24, 3
      %p338 = pnand %p336, %p337
      %p339 = pneg %p338
      // Predicated region
      $region49: #{tpu_custom_call.1} parent=5 // pred_check
        _
      $region50: #{tpu_custom_call.1} parent=5 // pred_check_branch
        %341 = sbr.rel (%p338) target = $region52
      $region51: #{tpu_custom_call.1} parent=5 // pred_region
        %s342 = ssub.s32 %s24, 1
        %s343 = sand.u32 %s37, 1
        %s344 = scalar_lea.sflag [#allocation3], %s343
        %s345 = sand.u32 %s37, 1
        %s346 = smul.addr %s345, 4
        %s347 = scalar_lea.vmem [#allocation2], %s346
        // Predicated region
        $region53: #{tpu_custom_call.1} parent=51 // pred_check
          %p348 = pneg %p50
        $region54: #{tpu_custom_call.1} parent=51 // pred_check_branch
          %350 = sbr.rel (%p348) target = $region56
        $region55: #{tpu_custom_call.1} parent=51 // pred_region
          %352 = dma.done %s344, 64
        $region56: #{tpu_custom_call.1} parent=51 // pred_fallthru
          _
        %s353 = sand.u32 %s29, 1
        %s354 = scalar_lea.sflag [#allocation6], %s353
        %s355 = sand.u32 %s63, 1
        %s356 = smul.addr %s355, 4
        %s357 = scalar_lea.vmem [#allocation5], %s356
        // Predicated region
        $region57: #{tpu_custom_call.1} parent=51 // pred_check
          %p358 = pneg %p76
        $region58: #{tpu_custom_call.1} parent=51 // pred_check_branch
          %360 = sbr.rel (%p358) target = $region60
        $region59: #{tpu_custom_call.1} parent=51 // pred_region
          %362 = dma.done %s354, 64
        $region60: #{tpu_custom_call.1} parent=51 // pred_fallthru
          _
        // Predicated region
        $region61: #{tpu_custom_call.1} parent=51 // pred_check
          %p363 = pneg %p97
        $region62: #{tpu_custom_call.1} parent=51 // pred_check_branch
          %365 = sbr.rel (%p363) target = $region64
        $region63: #{tpu_custom_call.1} parent=51 // pred_region
          %367 = dma.done [#allocation6], 128
        $region64: #{tpu_custom_call.1} parent=51 // pred_fallthru
          _
        // Predicated region
        $region65: #{tpu_custom_call.1} parent=51 // pred_check
          %p368 = pneg %p139
        $region66: #{tpu_custom_call.1} parent=51 // pred_check_branch
          %370 = sbr.rel (%p368) target = $region68
        $region67: #{tpu_custom_call.1} parent=51 // pred_region
          %372 = dma.done [#allocation9], 256
        $region68: #{tpu_custom_call.1} parent=51 // pred_fallthru
          _
        // Predicated region
        $region69: #{tpu_custom_call.1} parent=51 // pred_check
          %p373 = pneg %p181
        $region70: #{tpu_custom_call.1} parent=51 // pred_check_branch
          %375 = sbr.rel (%p373) target = $region72
        $region71: #{tpu_custom_call.1} parent=51 // pred_region
          %377 = dma.done [#allocation9], 1024
        $region72: #{tpu_custom_call.1} parent=51 // pred_fallthru
          _
        %s378 = sand.u32 %s37, 1
        %s379 = scalar_lea.sflag [#allocation3], %s378
        %s380 = sand.u32 %s37, 1
        %s381 = smul.addr %s380, 4
        %s382 = scalar_lea.vmem [#allocation2], %s381
        %p383 = pneg %p50
        %p384 = pneg %p47
        %s385 = sand.u32 %s29, 1
        %s386 = scalar_lea.sflag [#allocation6], %s385
        %s387 = sand.u32 %s63, 1
        %s388 = smul.addr %s387, 4
        %s389 = scalar_lea.vmem [#allocation5], %s388
        %p390 = pneg %p76
        %p391 = pneg %p73
        %p392 = pneg %p97
        %p393 = pneg %p94
        %p394 = pneg %p118
        %p395 = pneg %p115
        %p396 = pneg %p139
        %p397 = pneg %p136
        %p398 = pneg %p160
        %p399 = pneg %p157
        %p400 = pneg %p181
        %p401 = pneg %p178
        %p402 = pneg %p202
        %p403 = pneg %p199
        %p404 = pneg %p228
        %p405 = pneg %p225
        %s406 = sand.u32 %s215, 1
        %s407 = scalar_lea.sflag [#allocation4], %s406
        %s408 = sand.u32 %s215, 1
        %s409 = smul.addr %s408, 8
        %s410 = scalar_lea.vmem [#allocation11], %s409
        %v412 = vld [vmem:[%s347] sm:$0xf]
        %v413 = vld [vmem:[%s357] sm:$0xf]
        %v414 = vld [vmem:[#allocation7] sm:$0xf]
        %v415 = vld [vmem:[#allocation7 + $0x4] sm:$0xf]
        %v416 = vld [vmem:[%s3] sm:$0x1]
        %v418 = vperm.slane %v416, 0
        %v422 = vunpack.c.l.b16 %v414
        %v423 = vunpack.c.l.b16 %v415
        %v424 = vpack.c.b16 %v423, %v422
        %vm426 = vcmask 130048
        %v428 = vsel %vm426, %v412, 0
        %430 = vmatpush.bf16.msra.mxu0 0
        %431 = vmatpush.bf16.msra.mxu0 0
        %432 = vmatpush.bf16.msra.mxu0 0
        %433 = vmatpush.bf16.msra.mxu0 0
        %434 = vmatpush.bf16.msra.mxu0 0
        %435 = vmatpush.bf16.msra.mxu0 0
        %436 = vmatpush.bf16.msra.mxu0 0
        %437 = vmatpush.bf16.msra.mxu0 %v424
        %438 = vmatmul.bf16.gmra.mxu0 %v428
        %v439 = vpop.f32.mrf.mxu0
        %v440 = vadd.f32 %v418, %v439
        %v441 = vpop.f32.mrf.mxu0
        %442 = vdwg.mxu0
        %v443 = vld [vmem:[#allocation8] sm:$0xff]
        %v444 = vld [vmem:[#allocation8 + $0x8] sm:$0xff]
        %v445 = vld [vmem:[%s5] sm:$0x3]
        %v447 = vperm.slane %v445, 0
        %v448 = vperm.slane %v445, 1
        %v453 = vunpack.c.l.b16 %v443
        %v454 = vunpack.c.h.b16 %v443
        %v455 = vunpack.c.l.b16 %v444
        %v456 = vunpack.c.h.b16 %v444
        %v457 = vpack.c.b16 %v455, %v453
        %v458 = vpack.c.b16 %v456, %v454
        %v462 = vsel %vm426, %v413, 0
        %464 = vmatpush.bf16.msra.mxu0 0
        %465 = vmatpush.bf16.msra.mxu0 0
        %466 = vmatpush.bf16.msra.mxu0 0
        %467 = vmatpush.bf16.msra.mxu0 0
        %468 = vmatpush.bf16.msra.mxu0 0
        %469 = vmatpush.bf16.msra.mxu0 0
        %470 = vmatpush.bf16.msra.mxu0 0
        %471 = vmatpush.bf16.msra.mxu0 %v457
        %472 = vmatmul.bf16.gmra.mxu0 %v462
        %v473 = vpop.f32.mrf.mxu0
        %v474 = vadd.f32 %v447, %v473
        %v475 = vpop.f32.mrf.mxu0
        %476 = vdwg.mxu0
        %477 = vmatpush.bf16.msra.mxu0 0
        %478 = vmatpush.bf16.msra.mxu0 0
        %479 = vmatpush.bf16.msra.mxu0 0
        %480 = vmatpush.bf16.msra.mxu0 0
        %481 = vmatpush.bf16.msra.mxu0 0
        %482 = vmatpush.bf16.msra.mxu0 0
        %483 = vmatpush.bf16.msra.mxu0 0
        %484 = vmatpush.bf16.msra.mxu0 %v458
        %485 = vmatmul.bf16.gmra.mxu0 %v462
        %v486 = vpop.f32.mrf.mxu0
        %v487 = vadd.f32 %v448, %v486
        %v488 = vpop.f32.mrf.mxu0
        %489 = vdwg.mxu0
        %v490 = vpack.c.bf16 %v440, %v440
        %v491 = vpack.c.bf16 %v474, %v474
        %v492 = vpack.c.bf16 %v487, %v487
        %vm493 = vcmask 64512
        %v495 = vsel %vm493, %v490, 0
        %v498 = vsel %vm493, %v491, 0
        %500 = vmatpush.bf16.xpose.msra.mxu0 0
        %501 = vmatpush.bf16.xpose.msra.mxu0 0
        %502 = vmatpush.bf16.xpose.msra.mxu0 0
        %503 = vmatpush.bf16.xpose.msra.mxu0 0
        %504 = vmatpush.bf16.xpose.msra.mxu0 0
        %505 = vmatpush.bf16.xpose.msra.mxu0 0
        %506 = vmatpush.bf16.xpose.msra.mxu0 0
        %507 = vmatpush.bf16.xpose.msra.mxu0 %v498
        %508 = vmatmul.bf16.gmra.mxu0 %v495
        %v509 = vpop.f32.mrf.mxu0
        %v510 = vadd.f32 0.0, %v509
        %v511 = vpop.f32.mrf.mxu0
        %512 = vdwg.mxu0
        %v513 = vsel %vm493, %v510, -inf
        %514 = vmax.xlane.f32.xlu0 %v513
        %v515 = vpop.xlane.xlu0 %514
        %v516 = vsub.f32 %v510, %v515
        %v517 = vmul.f32 %v516, 1.442695
        %v518 = vpow.pop %v517
        %v519 = vsel %vm493, %v518, 0.0
        %520 = vadd.xlane.f32.xlu0 %v519
        %v521 = vpop.xlane.xlu0 %520
        %v522 = vrcp.pop %v521
        %v523 = vmul.f32 %v521, %v522
        %v524 = vsub.f32 1.0, %v523
        %v525 = vmul.f32 %v522, %v524
        %v526 = vadd.f32 %v522, %v525
        %vm527 = vweird.f32 %v521
        %vm528 = vweird.f32 %v522
        %vm529 = vmor %vm527, %vm528
        %v530 = vsel %vm529, %v522, %v526
        %v531 = vand.u32 2147483647, %v521
        %vm532 = vcmp.eq.f32.partialorder %v531, 8.507059e+37
        %v533 = vand.u32 %v521, 2147483648
        %v534 = vor.u32 1.1754944e-38, %v533
        %v535 = vsel %vm532, %v534, %v530
        %v536 = vmul.f32 %v518, %v535
        %v537 = vpack.c.bf16 %v536, %v536
        %v539 = vsel %vm493, %v537, 0
        %vm541 = vcmask 1043456
        %v543 = vsel %vm541, %v492, 0
        %545 = vmatpush.bf16.msra.mxu0 0
        %546 = vmatpush.bf16.msra.mxu0 0
        %547 = vmatpush.bf16.msra.mxu0 0
        %548 = vmatpush.bf16.msra.mxu0 0
        %549 = vmatpush.bf16.msra.mxu0 0
        %550 = vmatpush.bf16.msra.mxu0 0
        %551 = vmatpush.bf16.msra.mxu0 0
        %552 = vmatpush.bf16.msra.mxu0 %v543
        %553 = vmatmul.bf16.gmra.mxu0 %v539
        %v554 = vpop.f32.mrf.mxu0
        %v555 = vadd.f32 0.0, %v554
        %v556 = vpop.f32.mrf.mxu0
        %557 = vdwg.mxu0
        %v559 = vunpack.c.l.b16 %v490
        %v560 = vpack.c.b16 %v559, %v559
        %561 = vrot.lane.b32.xlu0 %v560, 120
        %v562 = vpop.permute.xlu0 %561
        %v564 = vunpack.c.l.b16 %v491
        %v565 = vpack.c.b16 %v564, %v564
        %566 = vrot.lane.b32.xlu0 %v565, 120
        %v567 = vpop.permute.xlu0 %566
        %v569 = vsel %vm493, %v562, 0
        %v572 = vsel %vm493, %v567, 0
        %574 = vmatpush.bf16.xpose.msra.mxu0 0
        %575 = vmatpush.bf16.xpose.msra.mxu0 0
        %576 = vmatpush.bf16.xpose.msra.mxu0 0
        %577 = vmatpush.bf16.xpose.msra.mxu0 0
        %578 = vmatpush.bf16.xpose.msra.mxu0 0
        %579 = vmatpush.bf16.xpose.msra.mxu0 0
        %580 = vmatpush.bf16.xpose.msra.mxu0 0
        %581 = vmatpush.bf16.xpose.msra.mxu0 %v572
        %582 = vmatmul.bf16.gmra.mxu0 %v569
        %v583 = vpop.f32.mrf.mxu0
        %v584 = vadd.f32 0.0, %v583
        %v585 = vpop.f32.mrf.mxu0
        %586 = vdwg.mxu0
        %v587 = vsel %vm493, %v584, -inf
        %588 = vmax.xlane.f32.xlu0 %v587
        %v589 = vpop.xlane.xlu0 %588
        %v590 = vsub.f32 %v584, %v589
        %v591 = vmul.f32 %v590, 1.442695
        %v592 = vpow.pop %v591
        %v593 = vsel %vm493, %v592, 0.0
        %594 = vadd.xlane.f32.xlu0 %v593
        %v595 = vpop.xlane.xlu0 %594
        %v596 = vrcp.pop %v595
        %v597 = vmul.f32 %v595, %v596
        %v598 = vsub.f32 1.0, %v597
        %v599 = vmul.f32 %v596, %v598
        %v600 = vadd.f32 %v596, %v599
        %vm601 = vweird.f32 %v595
        %vm602 = vweird.f32 %v596
        %vm603 = vmor %vm601, %vm602
        %v604 = vsel %vm603, %v596, %v600
        %v605 = vand.u32 2147483647, %v595
        %vm606 = vcmp.eq.f32.partialorder %v605, 8.507059e+37
        %v607 = vand.u32 %v595, 2147483648
        %v608 = vor.u32 1.1754944e-38, %v607
        %v609 = vsel %vm606, %v608, %v604
        %v610 = vmul.f32 %v592, %v609
        %v611 = vpack.c.bf16 %v610, %v610
        %v613 = vunpack.c.l.b16 %v492
        %v614 = vpack.c.b16 %v613, %v613
        %615 = vrot.lane.b32.xlu0 %v614, 120
        %v616 = vpop.permute.xlu0 %615
        %v618 = vsel %vm493, %v611, 0
        %v621 = vsel %vm541, %v616, 0
        %623 = vmatpush.bf16.msra.mxu0 0
        %624 = vmatpush.bf16.msra.mxu0 0
        %625 = vmatpush.bf16.msra.mxu0 0
        %626 = vmatpush.bf16.msra.mxu0 0
        %627 = vmatpush.bf16.msra.mxu0 0
        %628 = vmatpush.bf16.msra.mxu0 0
        %629 = vmatpush.bf16.msra.mxu0 0
        %630 = vmatpush.bf16.msra.mxu0 %v621
        %631 = vmatmul.bf16.gmra.mxu0 %v618
        %v632 = vpop.f32.mrf.mxu0
        %v633 = vadd.f32 0.0, %v632
        %v634 = vpop.f32.mrf.mxu0
        %635 = vdwg.mxu0
        %636 = vrot.lane.b32.xlu0 %v560, 112
        %v637 = vpop.permute.xlu0 %636
        %638 = vrot.lane.b32.xlu0 %v565, 112
        %v639 = vpop.permute.xlu0 %638
        %v641 = vsel %vm493, %v637, 0
        %v644 = vsel %vm493, %v639, 0
        %646 = vmatpush.bf16.xpose.msra.mxu0 0
        %647 = vmatpush.bf16.xpose.msra.mxu0 0
        %648 = vmatpush.bf16.xpose.msra.mxu0 0
        %649 = vmatpush.bf16.xpose.msra.mxu0 0
        %650 = vmatpush.bf16.xpose.msra.mxu0 0
        %651 = vmatpush.bf16.xpose.msra.mxu0 0
        %652 = vmatpush.bf16.xpose.msra.mxu0 0
        %653 = vmatpush.bf16.xpose.msra.mxu0 %v644
        %654 = vmatmul.bf16.gmra.mxu0 %v641
        %v655 = vpop.f32.mrf.mxu0
        %v656 = vadd.f32 0.0, %v655
        %v657 = vpop.f32.mrf.mxu0
        %658 = vdwg.mxu0
        %v659 = vsel %vm493, %v656, -inf
        %660 = vmax.xlane.f32.xlu0 %v659
        %v661 = vpop.xlane.xlu0 %660
        %v662 = vsub.f32 %v656, %v661
        %v663 = vmul.f32 %v662, 1.442695
        %v664 = vpow.pop %v663
        %v665 = vsel %vm493, %v664, 0.0
        %666 = vadd.xlane.f32.xlu0 %v665
        %v667 = vpop.xlane.xlu0 %666
        %v668 = vrcp.pop %v667
        %v669 = vmul.f32 %v667, %v668
        %v670 = vsub.f32 1.0, %v669
        %v671 = vmul.f32 %v668, %v670
        %v672 = vadd.f32 %v668, %v671
        %vm673 = vweird.f32 %v667
        %vm674 = vweird.f32 %v668
        %vm675 = vmor %vm673, %vm674
        %v676 = vsel %vm675, %v668, %v672
        %v677 = vand.u32 2147483647, %v667
        %vm678 = vcmp.eq.f32.partialorder %v677, 8.507059e+37
        %v679 = vand.u32 %v667, 2147483648
        %v680 = vor.u32 1.1754944e-38, %v679
        %v681 = vsel %vm678, %v680, %v676
        %v682 = vmul.f32 %v664, %v681
        %v683 = vpack.c.bf16 %v682, %v682
        %684 = vrot.lane.b32.xlu0 %v614, 112
        %v685 = vpop.permute.xlu0 %684
        %v687 = vsel %vm493, %v683, 0
        %v690 = vsel %vm541, %v685, 0
        %692 = vmatpush.bf16.msra.mxu0 0
        %693 = vmatpush.bf16.msra.mxu0 0
        %694 = vmatpush.bf16.msra.mxu0 0
        %695 = vmatpush.bf16.msra.mxu0 0
        %696 = vmatpush.bf16.msra.mxu0 0
        %697 = vmatpush.bf16.msra.mxu0 0
        %698 = vmatpush.bf16.msra.mxu0 0
        %699 = vmatpush.bf16.msra.mxu0 %v690
        %700 = vmatmul.bf16.gmra.mxu0 %v687
        %v701 = vpop.f32.mrf.mxu0
        %v702 = vadd.f32 0.0, %v701
        %v703 = vpop.f32.mrf.mxu0
        %704 = vdwg.mxu0
        %705 = vrot.lane.b32.xlu0 %v560, 104
        %v706 = vpop.permute.xlu0 %705
        %707 = vrot.lane.b32.xlu0 %v565, 104
        %v708 = vpop.permute.xlu0 %707
        %v710 = vsel %vm493, %v706, 0
        %v713 = vsel %vm493, %v708, 0
        %715 = vmatpush.bf16.xpose.msra.mxu0 0
        %716 = vmatpush.bf16.xpose.msra.mxu0 0
        %717 = vmatpush.bf16.xpose.msra.mxu0 0
        %718 = vmatpush.bf16.xpose.msra.mxu0 0
        %719 = vmatpush.bf16.xpose.msra.mxu0 0
        %720 = vmatpush.bf16.xpose.msra.mxu0 0
        %721 = vmatpush.bf16.xpose.msra.mxu0 0
        %722 = vmatpush.bf16.xpose.msra.mxu0 %v713
        %723 = vmatmul.bf16.gmra.mxu0 %v710
        %v724 = vpop.f32.mrf.mxu0
        %v725 = vadd.f32 0.0, %v724
        %v726 = vpop.f32.mrf.mxu0
        %727 = vdwg.mxu0
        %v728 = vsel %vm493, %v725, -inf
        %729 = vmax.xlane.f32.xlu0 %v728
        %v730 = vpop.xlane.xlu0 %729
        %v731 = vsub.f32 %v725, %v730
        %v732 = vmul.f32 %v731, 1.442695
        %v733 = vpow.pop %v732
        %v734 = vsel %vm493, %v733, 0.0
        %735 = vadd.xlane.f32.xlu0 %v734
        %v736 = vpop.xlane.xlu0 %735
        %v737 = vrcp.pop %v736
        %v738 = vmul.f32 %v736, %v737
        %v739 = vsub.f32 1.0, %v738
        %v740 = vmul.f32 %v737, %v739
        %v741 = vadd.f32 %v737, %v740
        %vm742 = vweird.f32 %v736
        %vm743 = vweird.f32 %v737
        %vm744 = vmor %vm742, %vm743
        %v745 = vsel %vm744, %v737, %v741
        %v746 = vand.u32 2147483647, %v736
        %vm747 = vcmp.eq.f32.partialorder %v746, 8.507059e+37
        %v748 = vand.u32 %v736, 2147483648
        %v749 = vor.u32 1.1754944e-38, %v748
        %v750 = vsel %vm747, %v749, %v745
        %v751 = vmul.f32 %v733, %v750
        %v752 = vpack.c.bf16 %v751, %v751
        %753 = vrot.lane.b32.xlu0 %v614, 104
        %v754 = vpop.permute.xlu0 %753
        %v756 = vsel %vm493, %v752, 0
        %v759 = vsel %vm541, %v754, 0
        %761 = vmatpush.bf16.msra.mxu0 0
        %762 = vmatpush.bf16.msra.mxu0 0
        %763 = vmatpush.bf16.msra.mxu0 0
        %764 = vmatpush.bf16.msra.mxu0 0
        %765 = vmatpush.bf16.msra.mxu0 0
        %766 = vmatpush.bf16.msra.mxu0 0
        %767 = vmatpush.bf16.msra.mxu0 0
        %768 = vmatpush.bf16.msra.mxu0 %v759
        %769 = vmatmul.bf16.gmra.mxu0 %v756
        %v770 = vpop.f32.mrf.mxu0
        %v771 = vadd.f32 0.0, %v770
        %v772 = vpop.f32.mrf.mxu0
        %773 = vdwg.mxu0
        %775 = vrot.lane.b32.xlu0 %v633, 8
        %v776 = vpop.permute.xlu0 %775
        %779 = vrot.lane.b32.xlu0 %v702, 16
        %v780 = vpop.permute.xlu0 %779
        %783 = vrot.lane.b32.xlu0 %v771, 24
        %v784 = vpop.permute.xlu0 %783
        %v786 = vsel %vm493, %v555, %v776
        %v787 = vsel %vm426, %v786, %v780
        %vm788 = vcmask 195584
        %v789 = vsel %vm788, %v787, %v784
        %vm790 = vcmask 261120
        %v791 = vsel %vm790, %v789, 0.0
        %v792 = vadd.f32 %v440, %v791
        %v793 = vpack.c.bf16 %v792, %v792
        %v794 = vld [vmem:[#allocation10] sm:$0xf]
        %v795 = vld [vmem:[#allocation10 + $0x4] sm:$0xf]
        %v796 = vld [vmem:[#allocation10 + $0x8] sm:$0xf]
        %v797 = vld [vmem:[#allocation10 + $0xc] sm:$0xf]
        %v798 = vld [vmem:[#allocation10 + $0x10] sm:$0xf]
        %v799 = vld [vmem:[#allocation10 + $0x14] sm:$0xf]
        %v800 = vld [vmem:[#allocation10 + $0x18] sm:$0xf]
        %v801 = vld [vmem:[#allocation10 + $0x1c] sm:$0xf]
        %v802 = vld [vmem:[#allocation10 + $0x20] sm:$0xf]
        %v803 = vld [vmem:[#allocation10 + $0x24] sm:$0xf]
        %v804 = vld [vmem:[#allocation10 + $0x28] sm:$0xf]
        %v805 = vld [vmem:[#allocation10 + $0x2c] sm:$0xf]
        %v806 = vld [vmem:[#allocation10 + $0x30] sm:$0xf]
        %v807 = vld [vmem:[#allocation10 + $0x34] sm:$0xf]
        %v808 = vld [vmem:[#allocation10 + $0x38] sm:$0xf]
        %v809 = vld [vmem:[#allocation10 + $0x3c] sm:$0xf]
        %v810 = vld [vmem:[%s7] sm:$0x1]
        %v812 = vperm.slane %v810, 0
        %v830 = vunpack.c.l.b16 %v794
        %v831 = vunpack.c.l.b16 %v795
        %v832 = vunpack.c.l.b16 %v796
        %v833 = vunpack.c.l.b16 %v797
        %v834 = vunpack.c.l.b16 %v798
        %v835 = vunpack.c.l.b16 %v799
        %v836 = vunpack.c.l.b16 %v800
        %v837 = vunpack.c.l.b16 %v801
        %v838 = vunpack.c.l.b16 %v802
        %v839 = vunpack.c.l.b16 %v803
        %v840 = vunpack.c.l.b16 %v804
        %v841 = vunpack.c.l.b16 %v805
        %v842 = vunpack.c.l.b16 %v806
        %v843 = vunpack.c.l.b16 %v807
        %v844 = vunpack.c.l.b16 %v808
        %v845 = vunpack.c.l.b16 %v809
        %v846 = vpack.c.b16 %v831, %v830
        %v847 = vpack.c.b16 %v833, %v832
        %v848 = vpack.c.b16 %v835, %v834
        %v849 = vpack.c.b16 %v837, %v836
        %v850 = vpack.c.b16 %v839, %v838
        %v851 = vpack.c.b16 %v841, %v840
        %v852 = vpack.c.b16 %v843, %v842
        %v853 = vpack.c.b16 %v845, %v844
        %862 = vmatpush.bf16.msra.mxu0 %v853
        %863 = vmatpush.bf16.msra.mxu0 %v852
        %864 = vmatpush.bf16.msra.mxu0 %v851
        %865 = vmatpush.bf16.msra.mxu0 %v850
        %866 = vmatpush.bf16.msra.mxu0 %v849
        %867 = vmatpush.bf16.msra.mxu0 %v848
        %868 = vmatpush.bf16.msra.mxu0 %v847
        %869 = vmatpush.bf16.msra.mxu0 %v846
        %870 = vmatmul.bf16.gmra.mxu0 %v793
        %v871 = vpop.f32.mrf.mxu0
        %v872 = vadd.f32 %v812, %v871
        %v873 = vpop.f32.mrf.mxu0
        %874 = vdwg.mxu0
        %v875 = vmax.f32 %v872, 0.0
        %v876 = vadd.f32 %v792, %v875
        %877 = vst [vmem:[%s410] sm:$0xff] %v876
        %s878 = sand.u32 %s215, 1
        %s879 = scalar_lea.sflag [#allocation4], %s878
        %s880 = sand.u32 %s215, 1
        %s881 = smul.addr %s880, 8
        %s882 = scalar_lea.vmem [#allocation11], %s881
        // Predicated region
        $region73: #{tpu_custom_call.1} parent=51 // pred_check
          %p883 = pneg %p225
        $region74: #{tpu_custom_call.1} parent=51 // pred_check_branch
          %885 = sbr.rel (%p883) target = $region76
        $region75: #{tpu_custom_call.1} parent=51 // pred_region
          %887 = vsyncadd %s879, 0
          %s888 = smul.addr %s29, 8
          %s889 = scalar_lea.hbm %s8, %s888
          %s891 = sshll.u32 %s882, 4
          %s892 = int_to_ptr.vmem [resolvable:$true] %s891
          %s893 = sshll.u32 %s889, 4
          %s894 = int_to_ptr.hbm [resolvable:$true] %s893
          %896 = dma.vmem_to_hbm [thread:$0]  %s892, 128, %s894, %s879
        $region76: #{tpu_custom_call.1} parent=51 // pred_fallthru
          _
      $region52: #{tpu_custom_call.1} parent=5 // pred_fallthru
        _
      %p897 = scmp.le.s32.totalorder 2, %s24
      // Predicated region
      $region77: #{tpu_custom_call.1} parent=5 // pred_check
        %p898 = pneg %p897
      $region78: #{tpu_custom_call.1} parent=5 // pred_check_branch
        %900 = sbr.rel (%p898) target = $region80
      $region79: #{tpu_custom_call.1} parent=5 // pred_region
        %s901 = ssub.s32 %s24, 2
        // Predicated region
        $region81: #{tpu_custom_call.1} parent=79 // pred_check
          %p902 = pneg %p231
        $region82: #{tpu_custom_call.1} parent=79 // pred_check_branch
          %904 = sbr.rel (%p902) target = $region84
        $region83: #{tpu_custom_call.1} parent=79 // pred_region
          %s905 = sand.u32 %s216, 1
          %s906 = scalar_lea.sflag [#allocation4], %s905
          %s907 = sand.u32 %s216, 1
          %s908 = smul.addr %s907, 8
          %s909 = scalar_lea.vmem [#allocation11], %s908
          %911 = dma.done %s906, 128
        $region84: #{tpu_custom_call.1} parent=79 // pred_fallthru
          _
      $region80: #{tpu_custom_call.1} parent=5 // pred_fallthru
        _
    $region6: #{tpu_custom_call.1} parent=1 // loop_footer
      %s28 = sadd.s32 1, %s24
    $region7: #{tpu_custom_call.1} parent=1 // loop_footer_branch
      %23 = sbr.rel target = $region3
    $region8: #{tpu_custom_call.1} parent=1 // loop_exit
      _
    %912 = vsyncpa [#allocation3], 1
    %s913 = scalar_lea.sflag [#allocation3], 1
    %914 = vsyncpa %s913, 1
    %915 = vsyncpa [#allocation6], 1
    %s916 = scalar_lea.sflag [#allocation6], 1
    %917 = vsyncpa %s916, 1
    %918 = vsyncpa [#allocation9], 1
    %919 = vsyncpa [#allocation4], 1
    %s920 = scalar_lea.sflag [#allocation4], 1
    %921 = vsyncpa %s920, 1

// kernel: tpu_custom_call.1
$region0: #{tpu_custom_call.1}
  #allocation0 [shape = 'u32[]', space=smem, size = 0x4, offset = 0x4, fixed_abs, tag = 'smem constant byte address 0x4 - core index']
  #allocation1 [shape = 'u32[72,128]{1,0:T(1,128)}', space=vmem, size = 0x9000, scoped, tag = 'internal scratch']
  %s0 = inlined_call_operand.hbm [shape: bf16[2,8,16], index: 0, kind: input, shape index: {}]
  %s1 = inlined_call_operand.hbm [shape: bf16[2,8,16], index: 1, kind: input, shape index: {}]
  %s2 = inlined_call_operand.hbm [shape: bf16[16,128], index: 2, kind: input, shape index: {}]
  %s3 = inlined_call_operand.vmem [shape: f32[1,128], index: 3, kind: input, shape index: {}]
  %s4 = inlined_call_operand.hbm [shape: bf16[16,256], index: 4, kind: input, shape index: {}]
  %s5 = inlined_call_operand.vmem [shape: f32[1,256], index: 5, kind: input, shape index: {}]
  %s6 = inlined_call_operand.hbm [shape: bf16[128,128], index: 6, kind: input, shape index: {}]
  %s7 = inlined_call_operand.vmem [shape: f32[1,128], index: 7, kind: input, shape index: {}]
  %s8 = inlined_call_operand.hbm [shape: f32[2,8,128], index: 8, kind: output, shape index: {}]
  %s9 = sld [smem:[#allocation0]]
  $region85: #{tpu_custom_call.1} parent=0
    _
  %s11 = ssub.s32 1, %s9
  %s12 = scalar_select 0, %s11, %s9
  $region1: #{tpu_custom_call.1} parent=0
    #allocation2 [shape = 'u8[4096]{0}', space=vmem, size = 0x1000, scoped, tag = 'input window, operand 0']
    #allocation3 [shape = 's32[2]{0}', space=sflag, size = 0x8, scoped, tag = 'scoped memory for tpu_custom_call.1']
    #allocation4 [shape = 's32[2]{0}', space=sflag, size = 0x8, scoped, tag = 'scoped memory for tpu_custom_call.1']
    #allocation5 [shape = 'u8[4096]{0}', space=vmem, size = 0x1000, scoped, tag = 'input window, operand 1']
    #allocation6 [shape = 's32[2]{0}', space=sflag, size = 0x8, scoped, tag = 'scoped memory for tpu_custom_call.1']
    #allocation7 [shape = 'u8[4096]{0}', space=vmem, size = 0x1000, scoped, tag = 'input window, operand 2, single buffered']
    #allocation8 [shape = 'u8[8192]{0}', space=vmem, size = 0x2000, scoped, tag = 'input window, operand 4, single buffered']
    #allocation9 [shape = 's32[1]{0}', space=sflag, size = 0x4, scoped, tag = 'scoped memory for tpu_custom_call.1']
    #allocation10 [shape = 'u8[32768]{0}', space=vmem, size = 0x8000, scoped, tag = 'input window, operand 6, single buffered']
    #allocation11 [shape = 'u8[8192]{0}', space=vmem, size = 0x2000, scoped, tag = 'output window, operand 0']
    %13 = vsyncpa [#allocation3], 0
    %s14 = scalar_lea.sflag [#allocation3], 1
    %15 = vsyncpa %s14, 0
    %16 = vsyncpa [#allocation6], 0
    %s17 = scalar_lea.sflag [#allocation6], 1
    %18 = vsyncpa %s17, 0
    %19 = vsyncpa [#allocation9], 0
    %20 = vsyncpa [#allocation4], 0
    %s21 = scalar_lea.sflag [#allocation4], 1
    %22 = vsyncpa %s21, 0
    loop: start=0, step=1, limit=4
    $region2: #{tpu_custom_call.1} parent=1 // loop_pre_header
      _
    $region3: #{tpu_custom_call.1} parent=1 // loop_header
      %s24 = sphi 0, %s28
      %p25 = scmp.ge.s32.totalorder %s24, 4
      %s34 = sphi 0, %s36
      %s37 = sphi 0, %s34
      %s38 = sphi 0, %s37
      %s54 = sphi 0, %s38
      %s60 = sphi 0, %s62
      %s63 = sphi 0, %s60
      %s64 = sphi 0, %s63
      %s80 = sphi 0, %s64
      %s84 = sphi 0, %s84
      %s86 = sphi 0, %s84
      %s87 = sphi 0, %s86
      %s101 = sphi 0, %s87
      %s105 = sphi 0, %s105
      %s107 = sphi 0, %s105
      %s108 = sphi 0, %s107
      %s122 = sphi 0, %s108
      %s126 = sphi 0, %s126
      %s128 = sphi 0, %s126
      %s129 = sphi 0, %s128
      %s143 = sphi 0, %s129
      %s147 = sphi 0, %s147
      %s149 = sphi 0, %s147
      %s150 = sphi 0, %s149
      %s164 = sphi 0, %s150
      %s168 = sphi 0, %s168
      %s170 = sphi 0, %s168
      %s171 = sphi 0, %s170
      %s185 = sphi 0, %s171
      %s189 = sphi 0, %s189
      %s191 = sphi 0, %s189
      %s192 = sphi 0, %s191
      %s206 = sphi 0, %s192
      %s212 = sphi 0, %s214
      %s215 = sphi 0, %s212
      %s216 = sphi 0, %s215
      %s232 = sphi 0, %s216
    $region4: #{tpu_custom_call.1} parent=1 // loop_header_branch
      %27 = sbr.rel (%p25) target = $region8
    $region5: #{tpu_custom_call.1} parent=1 // loop_body
      %s29 = ssub.s32 %s24, 1
      %s30 = ssub.s32 %s24, 2
      %s31 = sadd.s32 %s24, 1
      %s32 = ssub.s32 %s24, %s31
      %p33 = scmp.eq.s32.totalorder %s32, 0
      %s35 = sadd.s32 %s34, 1
      %s36 = scalar_select %p33, %s34, %s35
      %p39 = pneg %p33
      %p40 = scmp.eq.s32.totalorder %s24, 1
      %p41 = por %p39, %p40
      %p42 = scmp.ne.s32.totalorder %s34, %s37
      %p43 = scmp.eq.s32.totalorder %s24, 0
      %p44 = por %p42, %p43
      %p45 = scmp.ne.s32.totalorder %s34, %s37
      %p46 = scmp.eq.s32.totalorder %s29, 1
      %p47 = por %p45, %p46
      %p48 = scmp.ne.s32.totalorder %s37, %s38
      %p49 = scmp.eq.s32.totalorder %s29, 0
      %p50 = por %p48, %p49
      %p51 = scmp.ne.s32.totalorder %s37, %s38
      %p52 = scmp.eq.s32.totalorder %s30, 1
      %p53 = por %p51, %p52
      %p55 = scmp.ne.s32.totalorder %s38, %s54
      %p56 = scmp.eq.s32.totalorder %s30, 0
      %p57 = por %p55, %p56
      %s58 = ssub.s32 %s24, %s31
      %p59 = scmp.eq.s32.totalorder %s58, 0
      %s61 = sadd.s32 %s60, 1
      %s62 = scalar_select %p59, %s60, %s61
      %p65 = pneg %p59
      %p66 = scmp.eq.s32.totalorder %s24, 1
      %p67 = por %p65, %p66
      %p68 = scmp.ne.s32.totalorder %s60, %s63
      %p69 = scmp.eq.s32.totalorder %s24, 0
      %p70 = por %p68, %p69
      %p71 = scmp.ne.s32.totalorder %s60, %s63
      %p72 = scmp.eq.s32.totalorder %s29, 1
      %p73 = por %p71, %p72
      %p74 = scmp.ne.s32.totalorder %s63, %s64
      %p75 = scmp.eq.s32.totalorder %s29, 0
      %p76 = por %p74, %p75
      %p77 = scmp.ne.s32.totalorder %s63, %s64
      %p78 = scmp.eq.s32.totalorder %s30, 1
      %p79 = por %p77, %p78
      %p81 = scmp.ne.s32.totalorder %s64, %s80
      %p82 = scmp.eq.s32.totalorder %s30, 0
      %p83 = por %p81, %p82
      %s85 = sadd.s32 %s84, 1
      %p88 = scmp.eq.s32.totalorder %s24, 1
      %p89 = scmp.ne.s32.totalorder %s84, %s86
      %p90 = scmp.eq.s32.totalorder %s24, 0
      %p91 = por %p89, %p90
      %p92 = scmp.ne.s32.totalorder %s84, %s86
      %p93 = scmp.eq.s32.totalorder %s29, 1
      %p94 = por %p92, %p93
      %p95 = scmp.ne.s32.totalorder %s86, %s87
      %p96 = scmp.eq.s32.totalorder %s29, 0
      %p97 = por %p95, %p96
      %p98 = scmp.ne.s32.totalorder %s86, %s87
      %p99 = scmp.eq.s32.totalorder %s30, 1
      %p100 = por %p98, %p99
      %p102 = scmp.ne.s32.totalorder %s87, %s101
      %p103 = scmp.eq.s32.totalorder %s30, 0
      %p104 = por %p102, %p103
      %s106 = sadd.s32 %s105, 1
      %p109 = scmp.eq.s32.totalorder %s24, 1
      %p110 = scmp.ne.s32.totalorder %s105, %s107
      %p111 = scmp.eq.s32.totalorder %s24, 0
      %p112 = por %p110, %p111
      %p113 = scmp.ne.s32.totalorder %s105, %s107
      %p114 = scmp.eq.s32.totalorder %s29, 1
      %p115 = por %p113, %p114
      %p116 = scmp.ne.s32.totalorder %s107, %s108
      %p117 = scmp.eq.s32.totalorder %s29, 0
      %p118 = por %p116, %p117
      %p119 = scmp.ne.s32.totalorder %s107, %s108
      %p120 = scmp.eq.s32.totalorder %s30, 1
      %p121 = por %p119, %p120
      %p123 = scmp.ne.s32.totalorder %s108, %s122
      %p124 = scmp.eq.s32.totalorder %s30, 0
      %p125 = por %p123, %p124
      %s127 = sadd.s32 %s126, 1
      %p130 = scmp.eq.s32.totalorder %s24, 1
      %p131 = scmp.ne.s32.totalorder %s126, %s128
      %p132 = scmp.eq.s32.totalorder %s24, 0
      %p133 = por %p131, %p132
      %p134 = scmp.ne.s32.totalorder %s126, %s128
      %p135 = scmp.eq.s32.totalorder %s29, 1
      %p136 = por %p134, %p135
      %p137 = scmp.ne.s32.totalorder %s128, %s129
      %p138 = scmp.eq.s32.totalorder %s29, 0
      %p139 = por %p137, %p138
      %p140 = scmp.ne.s32.totalorder %s128, %s129
      %p141 = scmp.eq.s32.totalorder %s30, 1
      %p142 = por %p140, %p141
      %p144 = scmp.ne.s32.totalorder %s129, %s143
      %p145 = scmp.eq.s32.totalorder %s30, 0
      %p146 = por %p144, %p145
      %s148 = sadd.s32 %s147, 1
      %p151 = scmp.eq.s32.totalorder %s24, 1
      %p152 = scmp.ne.s32.totalorder %s147, %s149
      %p153 = scmp.eq.s32.totalorder %s24, 0
      %p154 = por %p152, %p153
      %p155 = scmp.ne.s32.totalorder %s147, %s149
      %p156 = scmp.eq.s32.totalorder %s29, 1
      %p157 = por %p155, %p156
      %p158 = scmp.ne.s32.totalorder %s149, %s150
      %p159 = scmp.eq.s32.totalorder %s29, 0
      %p160 = por %p158, %p159
      %p161 = scmp.ne.s32.totalorder %s149, %s150
      %p162 = scmp.eq.s32.totalorder %s30, 1
      %p163 = por %p161, %p162
      %p165 = scmp.ne.s32.totalorder %s150, %s164
      %p166 = scmp.eq.s32.totalorder %s30, 0
      %p167 = por %p165, %p166
      %s169 = sadd.s32 %s168, 1
      %p172 = scmp.eq.s32.totalorder %s24, 1
      %p173 = scmp.ne.s32.totalorder %s168, %s170
      %p174 = scmp.eq.s32.totalorder %s24, 0
      %p175 = por %p173, %p174
      %p176 = scmp.ne.s32.totalorder %s168, %s170
      %p177 = scmp.eq.s32.totalorder %s29, 1
      %p178 = por %p176, %p177
      %p179 = scmp.ne.s32.totalorder %s170, %s171
      %p180 = scmp.eq.s32.totalorder %s29, 0
      %p181 = por %p179, %p180
      %p182 = scmp.ne.s32.totalorder %s170, %s171
      %p183 = scmp.eq.s32.totalorder %s30, 1
      %p184 = por %p182, %p183
      %p186 = scmp.ne.s32.totalorder %s171, %s185
      %p187 = scmp.eq.s32.totalorder %s30, 0
      %p188 = por %p186, %p187
      %s190 = sadd.s32 %s189, 1
      %p193 = scmp.eq.s32.totalorder %s24, 1
      %p194 = scmp.ne.s32.totalorder %s189, %s191
      %p195 = scmp.eq.s32.totalorder %s24, 0
      %p196 = por %p194, %p195
      %p197 = scmp.ne.s32.totalorder %s189, %s191
      %p198 = scmp.eq.s32.totalorder %s29, 1
      %p199 = por %p197, %p198
      %p200 = scmp.ne.s32.totalorder %s191, %s192
      %p201 = scmp.eq.s32.totalorder %s29, 0
      %p202 = por %p200, %p201
      %p203 = scmp.ne.s32.totalorder %s191, %s192
      %p204 = scmp.eq.s32.totalorder %s30, 1
      %p205 = por %p203, %p204
      %p207 = scmp.ne.s32.totalorder %s192, %s206
      %p208 = scmp.eq.s32.totalorder %s30, 0
      %p209 = por %p207, %p208
      %s210 = ssub.s32 %s24, %s31
      %p211 = scmp.eq.s32.totalorder %s210, 0
      %s213 = sadd.s32 %s212, 1
      %s214 = scalar_select %p211, %s212, %s213
      %p217 = pneg %p211
      %p218 = scmp.eq.s32.totalorder %s24, 1
      %p219 = por %p217, %p218
      %p220 = scmp.ne.s32.totalorder %s212, %s215
      %p221 = scmp.eq.s32.totalorder %s24, 0
      %p222 = por %p220, %p221
      %p223 = scmp.ne.s32.totalorder %s212, %s215
      %p224 = scmp.eq.s32.totalorder %s29, 1
      %p225 = por %p223, %p224
      %p226 = scmp.ne.s32.totalorder %s215, %s216
      %p227 = scmp.eq.s32.totalorder %s29, 0
      %p228 = por %p226, %p227
      %p229 = scmp.ne.s32.totalorder %s215, %s216
      %p230 = scmp.eq.s32.totalorder %s30, 1
      %p231 = por %p229, %p230
      %p233 = scmp.ne.s32.totalorder %s216, %s232
      %p234 = scmp.eq.s32.totalorder %s30, 0
      %p235 = por %p233, %p234
      %p236 = scmp.le.s32.totalorder 1, %s24
      %p237 = scmp.lt.s32.totalorder %s24, 3
      %p238 = pnand %p236, %p237
      %p239 = pneg %p238
      // Predicated region
      $region9: #{tpu_custom_call.1} parent=5 // pred_check
        _
      $region10: #{tpu_custom_call.1} parent=5 // pred_check_branch
        %241 = sbr.rel (%p238) target = $region12
      $region11: #{tpu_custom_call.1} parent=5 // pred_region
        %s242 = ssub.s32 %s24, 1
        // Predicated region
        $region13: #{tpu_custom_call.1} parent=11 // pred_check
          %p243 = pneg %p97
        $region14: #{tpu_custom_call.1} parent=11 // pred_check_branch
          %245 = sbr.rel (%p243) target = $region16
        $region15: #{tpu_custom_call.1} parent=11 // pred_region
          %247 = vsyncadd [#allocation6], 0
          %s248 = sshll.u32 %s2, 4
          %s249 = int_to_ptr.hbm [resolvable:$true] %s248
          %s250 = sshll.u32 [#allocation7], 4
          %s251 = int_to_ptr.vmem [resolvable:$true] %s250
          %256 = dma.hbm_to_vmem [thread:$0]  %s249, 128, %s251, [#allocation6], 64, 64, 4
        $region16: #{tpu_custom_call.1} parent=11 // pred_fallthru
          _
        // Predicated region
        $region17: #{tpu_custom_call.1} parent=11 // pred_check
          %p257 = pneg %p118
        $region18: #{tpu_custom_call.1} parent=11 // pred_check_branch
          %259 = sbr.rel (%p257) target = $region20
        $region19: #{tpu_custom_call.1} parent=11 // pred_region
          _
        $region20: #{tpu_custom_call.1} parent=11 // pred_fallthru
          _
        // Predicated region
        $region21: #{tpu_custom_call.1} parent=11 // pred_check
          %p260 = pneg %p139
        $region22: #{tpu_custom_call.1} parent=11 // pred_check_branch
          %262 = sbr.rel (%p260) target = $region24
        $region23: #{tpu_custom_call.1} parent=11 // pred_region
          %264 = vsyncadd [#allocation9], 0
          %s265 = sshll.u32 %s4, 4
          %s266 = int_to_ptr.hbm [resolvable:$true] %s265
          %s267 = sshll.u32 [#allocation8], 4
          %s268 = int_to_ptr.vmem [resolvable:$true] %s267
          %273 = dma.hbm_to_vmem [thread:$0]  %s266, 256, %s268, [#allocation9], 128, 128, 8
        $region24: #{tpu_custom_call.1} parent=11 // pred_fallthru
          _
        // Predicated region
        $region25: #{tpu_custom_call.1} parent=11 // pred_check
          %p274 = pneg %p160
        $region26: #{tpu_custom_call.1} parent=11 // pred_check_branch
          %276 = sbr.rel (%p274) target = $region28
        $region27: #{tpu_custom_call.1} parent=11 // pred_region
          _
        $region28: #{tpu_custom_call.1} parent=11 // pred_fallthru
          _
        // Predicated region
        $region29: #{tpu_custom_call.1} parent=11 // pred_check
          %p277 = pneg %p181
        $region30: #{tpu_custom_call.1} parent=11 // pred_check_branch
          %279 = sbr.rel (%p277) target = $region32
        $region31: #{tpu_custom_call.1} parent=11 // pred_region
          %281 = vsyncadd [#allocation9], 0
          %s282 = sshll.u32 %s6, 4
          %s283 = int_to_ptr.hbm [resolvable:$true] %s282
          %s284 = sshll.u32 [#allocation10], 4
          %s285 = int_to_ptr.vmem [resolvable:$true] %s284
          %290 = dma.hbm_to_vmem [thread:$0]  %s283, 1024, %s285, [#allocation9], 64, 64, 4
        $region32: #{tpu_custom_call.1} parent=11 // pred_fallthru
          _
        // Predicated region
        $region33: #{tpu_custom_call.1} parent=11 // pred_check
          %p291 = pneg %p202
        $region34: #{tpu_custom_call.1} parent=11 // pred_check_branch
          %293 = sbr.rel (%p291) target = $region36
        $region35: #{tpu_custom_call.1} parent=11 // pred_region
          _
        $region36: #{tpu_custom_call.1} parent=11 // pred_fallthru
          _
      $region12: #{tpu_custom_call.1} parent=5 // pred_fallthru
        _
      %p294 = scmp.lt.s32.totalorder %s24, 2
      // Predicated region
      $region37: #{tpu_custom_call.1} parent=5 // pred_check
        %p295 = pneg %p294
      $region38: #{tpu_custom_call.1} parent=5 // pred_check_branch
        %297 = sbr.rel (%p295) target = $region40
      $region39: #{tpu_custom_call.1} parent=5 // pred_region
        // Predicated region
        $region41: #{tpu_custom_call.1} parent=39 // pred_check
          %p298 = pneg %p44
        $region42: #{tpu_custom_call.1} parent=39 // pred_check_branch
          %300 = sbr.rel (%p298) target = $region44
        $region43: #{tpu_custom_call.1} parent=39 // pred_region
          %s301 = sand.u32 %s34, 1
          %s302 = scalar_lea.sflag [#allocation3], %s301
          %s303 = sand.u32 %s34, 1
          %s304 = smul.addr %s303, 4
          %s305 = scalar_lea.vmem [#allocation2], %s304
          %307 = vsyncadd %s302, 0
          %s308 = smul.addr %s24, 4
          %s309 = scalar_lea.hbm %s0, %s308
          %s311 = sshll.u32 %s309, 4
          %s312 = int_to_ptr.hbm [resolvable:$true] %s311
          %s313 = sshll.u32 %s305, 4
          %s314 = int_to_ptr.vmem [resolvable:$true] %s313
          %316 = dma.hbm_to_vmem [thread:$0]  %s312, 64, %s314, %s302
        $region44: #{tpu_custom_call.1} parent=39 // pred_fallthru
          _
        // Predicated region
        $region45: #{tpu_custom_call.1} parent=39 // pred_check
          %p317 = pneg %p70
        $region46: #{tpu_custom_call.1} parent=39 // pred_check_branch
          %319 = sbr.rel (%p317) target = $region48
        $region47: #{tpu_custom_call.1} parent=39 // pred_region
          %s320 = sand.u32 %s24, 1
          %s321 = scalar_lea.sflag [#allocation6], %s320
          %s322 = sand.u32 %s60, 1
          %s323 = smul.addr %s322, 4
          %s324 = scalar_lea.vmem [#allocation5], %s323
          %326 = vsyncadd %s321, 0
          %s327 = smul.addr %s24, 4
          %s328 = scalar_lea.hbm %s1, %s327
          %s330 = sshll.u32 %s328, 4
          %s331 = int_to_ptr.hbm [resolvable:$true] %s330
          %s332 = sshll.u32 %s324, 4
          %s333 = int_to_ptr.vmem [resolvable:$true] %s332
          %335 = dma.hbm_to_vmem [thread:$0]  %s331, 64, %s333, %s321
        $region48: #{tpu_custom_call.1} parent=39 // pred_fallthru
          _
      $region40: #{tpu_custom_call.1} parent=5 // pred_fallthru
        _
      %p336 = scmp.le.s32.totalorder 1, %s24
      %p337 = scmp.lt.s32.totalorder %s24, 3
      %p338 = pnand %p336, %p337
      %p339 = pneg %p338
      // Predicated region
      $region49: #{tpu_custom_call.1} parent=5 // pred_check
        _
      $region50: #{tpu_custom_call.1} parent=5 // pred_check_branch
        %341 = sbr.rel (%p338) target = $region52
      $region51: #{tpu_custom_call.1} parent=5 // pred_region
        %s342 = ssub.s32 %s24, 1
        %s343 = sand.u32 %s37, 1
        %s344 = scalar_lea.sflag [#allocation3], %s343
        %s345 = sand.u32 %s37, 1
        %s346 = smul.addr %s345, 4
        %s347 = scalar_lea.vmem [#allocation2], %s346
        // Predicated region
        $region53: #{tpu_custom_call.1} parent=51 // pred_check
          %p348 = pneg %p50
        $region54: #{tpu_custom_call.1} parent=51 // pred_check_branch
          %350 = sbr.rel (%p348) target = $region56
        $region55: #{tpu_custom_call.1} parent=51 // pred_region
          %352 = dma.done %s344, 64
        $region56: #{tpu_custom_call.1} parent=51 // pred_fallthru
          _
        %s353 = sand.u32 %s29, 1
        %s354 = scalar_lea.sflag [#allocation6], %s353
        %s355 = sand.u32 %s63, 1
        %s356 = smul.addr %s355, 4
        %s357 = scalar_lea.vmem [#allocation5], %s356
        // Predicated region
        $region57: #{tpu_custom_call.1} parent=51 // pred_check
          %p358 = pneg %p76
        $region58: #{tpu_custom_call.1} parent=51 // pred_check_branch
          %360 = sbr.rel (%p358) target = $region60
        $region59: #{tpu_custom_call.1} parent=51 // pred_region
          %362 = dma.done %s354, 64
        $region60: #{tpu_custom_call.1} parent=51 // pred_fallthru
          _
        // Predicated region
        $region61: #{tpu_custom_call.1} parent=51 // pred_check
          %p363 = pneg %p97
        $region62: #{tpu_custom_call.1} parent=51 // pred_check_branch
          %365 = sbr.rel (%p363) target = $region64
        $region63: #{tpu_custom_call.1} parent=51 // pred_region
          %367 = dma.done [#allocation6], 128
        $region64: #{tpu_custom_call.1} parent=51 // pred_fallthru
          _
        // Predicated region
        $region65: #{tpu_custom_call.1} parent=51 // pred_check
          %p368 = pneg %p139
        $region66: #{tpu_custom_call.1} parent=51 // pred_check_branch
          %370 = sbr.rel (%p368) target = $region68
        $region67: #{tpu_custom_call.1} parent=51 // pred_region
          %372 = dma.done [#allocation9], 256
        $region68: #{tpu_custom_call.1} parent=51 // pred_fallthru
          _
        // Predicated region
        $region69: #{tpu_custom_call.1} parent=51 // pred_check
          %p373 = pneg %p181
        $region70: #{tpu_custom_call.1} parent=51 // pred_check_branch
          %375 = sbr.rel (%p373) target = $region72
        $region71: #{tpu_custom_call.1} parent=51 // pred_region
          %377 = dma.done [#allocation9], 1024
        $region72: #{tpu_custom_call.1} parent=51 // pred_fallthru
          _
        %s378 = sand.u32 %s37, 1
        %s379 = scalar_lea.sflag [#allocation3], %s378
        %s380 = sand.u32 %s37, 1
        %s381 = smul.addr %s380, 4
        %s382 = scalar_lea.vmem [#allocation2], %s381
        %p383 = pneg %p50
        %p384 = pneg %p47
        %s385 = sand.u32 %s29, 1
        %s386 = scalar_lea.sflag [#allocation6], %s385
        %s387 = sand.u32 %s63, 1
        %s388 = smul.addr %s387, 4
        %s389 = scalar_lea.vmem [#allocation5], %s388
        %p390 = pneg %p76
        %p391 = pneg %p73
        %p392 = pneg %p97
        %p393 = pneg %p94
        %p394 = pneg %p118
        %p395 = pneg %p115
        %p396 = pneg %p139
        %p397 = pneg %p136
        %p398 = pneg %p160
        %p399 = pneg %p157
        %p400 = pneg %p181
        %p401 = pneg %p178
        %p402 = pneg %p202
        %p403 = pneg %p199
        %p404 = pneg %p228
        %p405 = pneg %p225
        %s406 = sand.u32 %s215, 1
        %s407 = scalar_lea.sflag [#allocation4], %s406
        %s408 = sand.u32 %s215, 1
        %s409 = smul.addr %s408, 8
        %s410 = scalar_lea.vmem [#allocation11], %s409
        %v412 = vld [vmem:[%s347] sm:$0xf]
        %v413 = vld [vmem:[%s357] sm:$0xf]
        %v414 = vld [vmem:[#allocation7] sm:$0xf]
        %v415 = vld [vmem:[#allocation7 + $0x4] sm:$0xf]
        %v416 = vld [vmem:[%s3] sm:$0x1]
        %v418 = vperm.slane %v416, 0
        %v422 = vunpack.c.l.b16 %v414
        %v423 = vunpack.c.l.b16 %v415
        %v424 = vpack.c.b16 %v423, %v422
        %vm426 = vcmask 130048
        %v428 = vsel %vm426, %v412, 0
        %430 = vmatpush.bf16.msra.mxu0 0
        %431 = vmatpush.bf16.msra.mxu0 0
        %432 = vmatpush.bf16.msra.mxu0 0
        %433 = vmatpush.bf16.msra.mxu0 0
        %434 = vmatpush.bf16.msra.mxu0 0
        %435 = vmatpush.bf16.msra.mxu0 0
        %436 = vmatpush.bf16.msra.mxu0 0
        %437 = vmatpush.bf16.msra.mxu0 %v424
        %438 = vmatmul.bf16.gmra.mxu0 %v428
        %v439 = vpop.f32.mrf.mxu0
        %v440 = vadd.f32 %v418, %v439
        %v441 = vpop.f32.mrf.mxu0
        %442 = vdwg.mxu0
        %v443 = vld [vmem:[#allocation8] sm:$0xff]
        %v444 = vld [vmem:[#allocation8 + $0x8] sm:$0xff]
        %v445 = vld [vmem:[%s5] sm:$0x3]
        %v447 = vperm.slane %v445, 0
        %v448 = vperm.slane %v445, 1
        %v453 = vunpack.c.l.b16 %v443
        %v454 = vunpack.c.h.b16 %v443
        %v455 = vunpack.c.l.b16 %v444
        %v456 = vunpack.c.h.b16 %v444
        %v457 = vpack.c.b16 %v455, %v453
        %v458 = vpack.c.b16 %v456, %v454
        %v462 = vsel %vm426, %v413, 0
        %464 = vmatpush.bf16.msra.mxu0 0
        %465 = vmatpush.bf16.msra.mxu0 0
        %466 = vmatpush.bf16.msra.mxu0 0
        %467 = vmatpush.bf16.msra.mxu0 0
        %468 = vmatpush.bf16.msra.mxu0 0
        %469 = vmatpush.bf16.msra.mxu0 0
        %470 = vmatpush.bf16.msra.mxu0 0
        %471 = vmatpush.bf16.msra.mxu0 %v457
        %472 = vmatmul.bf16.gmra.mxu0 %v462
        %v473 = vpop.f32.mrf.mxu0
        %v474 = vadd.f32 %v447, %v473
        %v475 = vpop.f32.mrf.mxu0
        %476 = vdwg.mxu0
        %477 = vmatpush.bf16.msra.mxu0 0
        %478 = vmatpush.bf16.msra.mxu0 0
        %479 = vmatpush.bf16.msra.mxu0 0
        %480 = vmatpush.bf16.msra.mxu0 0
        %481 = vmatpush.bf16.msra.mxu0 0
        %482 = vmatpush.bf16.msra.mxu0 0
        %483 = vmatpush.bf16.msra.mxu0 0
        %484 = vmatpush.bf16.msra.mxu0 %v458
        %485 = vmatmul.bf16.gmra.mxu0 %v462
        %v486 = vpop.f32.mrf.mxu0
        %v487 = vadd.f32 %v448, %v486
        %v488 = vpop.f32.mrf.mxu0
        %489 = vdwg.mxu0
        %v490 = vpack.c.bf16 %v440, %v440
        %v491 = vpack.c.bf16 %v474, %v474
        %v492 = vpack.c.bf16 %v487, %v487
        %vm493 = vcmask 64512
        %v495 = vsel %vm493, %v490, 0
        %v498 = vsel %vm493, %v491, 0
        %500 = vmatpush.bf16.xpose.msra.mxu0 0
        %501 = vmatpush.bf16.xpose.msra.mxu0 0
        %502 = vmatpush.bf16.xpose.msra.mxu0 0
        %503 = vmatpush.bf16.xpose.msra.mxu0 0
        %504 = vmatpush.bf16.xpose.msra.mxu0 0
        %505 = vmatpush.bf16.xpose.msra.mxu0 0
        %506 = vmatpush.bf16.xpose.msra.mxu0 0
        %507 = vmatpush.bf16.xpose.msra.mxu0 %v498
        %508 = vmatmul.bf16.gmra.mxu0 %v495
        %v509 = vpop.f32.mrf.mxu0
        %v510 = vadd.f32 0.0, %v509
        %v511 = vpop.f32.mrf.mxu0
        %512 = vdwg.mxu0
        %v513 = vsel %vm493, %v510, -inf
        %514 = vmax.xlane.f32.xlu0 %v513
        %v515 = vpop.xlane.xlu0 %514
        %v516 = vsub.f32 %v510, %v515
        %v517 = vmul.f32 %v516, 1.442695
        %v518 = vpow.pop %v517
        %v519 = vsel %vm493, %v518, 0.0
        %520 = vadd.xlane.f32.xlu0 %v519
        %v521 = vpop.xlane.xlu0 %520
        %v522 = vrcp.pop %v521
        %v523 = vmul.f32 %v521, %v522
        %v524 = vsub.f32 1.0, %v523
        %v525 = vmul.f32 %v522, %v524
        %v526 = vadd.f32 %v522, %v525
        %vm527 = vweird.f32 %v521
        %vm528 = vweird.f32 %v522
        %vm529 = vmor %vm527, %vm528
        %v530 = vsel %vm529, %v522, %v526
        %v531 = vand.u32 2147483647, %v521
        %vm532 = vcmp.eq.f32.partialorder %v531, 8.507059e+37
        %v533 = vand.u32 %v521, 2147483648
        %v534 = vor.u32 1.1754944e-38, %v533
        %v535 = vsel %vm532, %v534, %v530
        %v536 = vmul.f32 %v518, %v535
        %v537 = vpack.c.bf16 %v536, %v536
        %v539 = vsel %vm493, %v537, 0
        %vm541 = vcmask 1043456
        %v543 = vsel %vm541, %v492, 0
        %545 = vmatpush.bf16.msra.mxu0 0
        %546 = vmatpush.bf16.msra.mxu0 0
        %547 = vmatpush.bf16.msra.mxu0 0
        %548 = vmatpush.bf16.msra.mxu0 0
        %549 = vmatpush.bf16.msra.mxu0 0
        %550 = vmatpush.bf16.msra.mxu0 0
        %551 = vmatpush.bf16.msra.mxu0 0
        %552 = vmatpush.bf16.msra.mxu0 %v543
        %553 = vmatmul.bf16.gmra.mxu0 %v539
        %v554 = vpop.f32.mrf.mxu0
        %v555 = vadd.f32 0.0, %v554
        %v556 = vpop.f32.mrf.mxu0
        %557 = vdwg.mxu0
        %v559 = vunpack.c.l.b16 %v490
        %v560 = vpack.c.b16 %v559, %v559
        %561 = vrot.lane.b32.xlu0 %v560, 120
        %v562 = vpop.permute.xlu0 %561
        %v564 = vunpack.c.l.b16 %v491
        %v565 = vpack.c.b16 %v564, %v564
        %566 = vrot.lane.b32.xlu0 %v565, 120
        %v567 = vpop.permute.xlu0 %566
        %v569 = vsel %vm493, %v562, 0
        %v572 = vsel %vm493, %v567, 0
        %574 = vmatpush.bf16.xpose.msra.mxu0 0
        %575 = vmatpush.bf16.xpose.msra.mxu0 0
        %576 = vmatpush.bf16.xpose.msra.mxu0 0
        %577 = vmatpush.bf16.xpose.msra.mxu0 0
        %578 = vmatpush.bf16.xpose.msra.mxu0 0
        %579 = vmatpush.bf16.xpose.msra.mxu0 0
        %580 = vmatpush.bf16.xpose.msra.mxu0 0
        %581 = vmatpush.bf16.xpose.msra.mxu0 %v572
        %582 = vmatmul.bf16.gmra.mxu0 %v569
        %v583 = vpop.f32.mrf.mxu0
        %v584 = vadd.f32 0.0, %v583
        %v585 = vpop.f32.mrf.mxu0
        %586 = vdwg.mxu0
        %v587 = vsel %vm493, %v584, -inf
        %588 = vmax.xlane.f32.xlu0 %v587
        %v589 = vpop.xlane.xlu0 %588
        %v590 = vsub.f32 %v584, %v589
        %v591 = vmul.f32 %v590, 1.442695
        %v592 = vpow.pop %v591
        %v593 = vsel %vm493, %v592, 0.0
        %594 = vadd.xlane.f32.xlu0 %v593
        %v595 = vpop.xlane.xlu0 %594
        %v596 = vrcp.pop %v595
        %v597 = vmul.f32 %v595, %v596
        %v598 = vsub.f32 1.0, %v597
        %v599 = vmul.f32 %v596, %v598
        %v600 = vadd.f32 %v596, %v599
        %vm601 = vweird.f32 %v595
        %vm602 = vweird.f32 %v596
        %vm603 = vmor %vm601, %vm602
        %v604 = vsel %vm603, %v596, %v600
        %v605 = vand.u32 2147483647, %v595
        %vm606 = vcmp.eq.f32.partialorder %v605, 8.507059e+37
        %v607 = vand.u32 %v595, 2147483648
        %v608 = vor.u32 1.1754944e-38, %v607
        %v609 = vsel %vm606, %v608, %v604
        %v610 = vmul.f32 %v592, %v609
        %v611 = vpack.c.bf16 %v610, %v610
        %v613 = vunpack.c.l.b16 %v492
        %v614 = vpack.c.b16 %v613, %v613
        %615 = vrot.lane.b32.xlu0 %v614, 120
        %v616 = vpop.permute.xlu0 %615
        %v618 = vsel %vm493, %v611, 0
        %v621 = vsel %vm541, %v616, 0
        %623 = vmatpush.bf16.msra.mxu0 0
        %624 = vmatpush.bf16.msra.mxu0 0
        %625 = vmatpush.bf16.msra.mxu0 0
        %626 = vmatpush.bf16.msra.mxu0 0
        %627 = vmatpush.bf16.msra.mxu0 0
        %628 = vmatpush.bf16.msra.mxu0 0
        %629 = vmatpush.bf16.msra.mxu0 0
        %630 = vmatpush.bf16.msra.mxu0 %v621
        %631 = vmatmul.bf16.gmra.mxu0 %v618
        %v632 = vpop.f32.mrf.mxu0
        %v633 = vadd.f32 0.0, %v632
        %v634 = vpop.f32.mrf.mxu0
        %635 = vdwg.mxu0
        %636 = vrot.lane.b32.xlu0 %v560, 112
        %v637 = vpop.permute.xlu0 %636
        %638 = vrot.lane.b32.xlu0 %v565, 112
        %v639 = vpop.permute.xlu0 %638
        %v641 = vsel %vm493, %v637, 0
        %v644 = vsel %vm493, %v639, 0
        %646 = vmatpush.bf16.xpose.msra.mxu0 0
        %647 = vmatpush.bf16.xpose.msra.mxu0 0
        %648 = vmatpush.bf16.xpose.msra.mxu0 0
        %649 = vmatpush.bf16.xpose.msra.mxu0 0
        %650 = vmatpush.bf16.xpose.msra.mxu0 0
        %651 = vmatpush.bf16.xpose.msra.mxu0 0
        %652 = vmatpush.bf16.xpose.msra.mxu0 0
        %653 = vmatpush.bf16.xpose.msra.mxu0 %v644
        %654 = vmatmul.bf16.gmra.mxu0 %v641
        %v655 = vpop.f32.mrf.mxu0
        %v656 = vadd.f32 0.0, %v655
        %v657 = vpop.f32.mrf.mxu0
        %658 = vdwg.mxu0
        %v659 = vsel %vm493, %v656, -inf
        %660 = vmax.xlane.f32.xlu0 %v659
        %v661 = vpop.xlane.xlu0 %660
        %v662 = vsub.f32 %v656, %v661
        %v663 = vmul.f32 %v662, 1.442695
        %v664 = vpow.pop %v663
        %v665 = vsel %vm493, %v664, 0.0
        %666 = vadd.xlane.f32.xlu0 %v665
        %v667 = vpop.xlane.xlu0 %666
        %v668 = vrcp.pop %v667
        %v669 = vmul.f32 %v667, %v668
        %v670 = vsub.f32 1.0, %v669
        %v671 = vmul.f32 %v668, %v670
        %v672 = vadd.f32 %v668, %v671
        %vm673 = vweird.f32 %v667
        %vm674 = vweird.f32 %v668
        %vm675 = vmor %vm673, %vm674
        %v676 = vsel %vm675, %v668, %v672
        %v677 = vand.u32 2147483647, %v667
        %vm678 = vcmp.eq.f32.partialorder %v677, 8.507059e+37
        %v679 = vand.u32 %v667, 2147483648
        %v680 = vor.u32 1.1754944e-38, %v679
        %v681 = vsel %vm678, %v680, %v676
        %v682 = vmul.f32 %v664, %v681
        %v683 = vpack.c.bf16 %v682, %v682
        %684 = vrot.lane.b32.xlu0 %v614, 112
        %v685 = vpop.permute.xlu0 %684
        %v687 = vsel %vm493, %v683, 0
        %v690 = vsel %vm541, %v685, 0
        %692 = vmatpush.bf16.msra.mxu0 0
        %693 = vmatpush.bf16.msra.mxu0 0
        %694 = vmatpush.bf16.msra.mxu0 0
        %695 = vmatpush.bf16.msra.mxu0 0
        %696 = vmatpush.bf16.msra.mxu0 0
        %697 = vmatpush.bf16.msra.mxu0 0
        %698 = vmatpush.bf16.msra.mxu0 0
        %699 = vmatpush.bf16.msra.mxu0 %v690
        %700 = vmatmul.bf16.gmra.mxu0 %v687
        %v701 = vpop.f32.mrf.mxu0
        %v702 = vadd.f32 0.0, %v701
        %v703 = vpop.f32.mrf.mxu0
        %704 = vdwg.mxu0
        %705 = vrot.lane.b32.xlu0 %v560, 104
        %v706 = vpop.permute.xlu0 %705
        %707 = vrot.lane.b32.xlu0 %v565, 104
        %v708 = vpop.permute.xlu0 %707
        %v710 = vsel %vm493, %v706, 0
        %v713 = vsel %vm493, %v708, 0
        %715 = vmatpush.bf16.xpose.msra.mxu0 0
        %716 = vmatpush.bf16.xpose.msra.mxu0 0
        %717 = vmatpush.bf16.xpose.msra.mxu0 0
        %718 = vmatpush.bf16.xpose.msra.mxu0 0
        %719 = vmatpush.bf16.xpose.msra.mxu0 0
        %720 = vmatpush.bf16.xpose.msra.mxu0 0
        %721 = vmatpush.bf16.xpose.msra.mxu0 0
        %722 = vmatpush.bf16.xpose.msra.mxu0 %v713
        %723 = vmatmul.bf16.gmra.mxu0 %v710
        %v724 = vpop.f32.mrf.mxu0
        %v725 = vadd.f32 0.0, %v724
        %v726 = vpop.f32.mrf.mxu0
        %727 = vdwg.mxu0
        %v728 = vsel %vm493, %v725, -inf
        %729 = vmax.xlane.f32.xlu0 %v728
        %v730 = vpop.xlane.xlu0 %729
        %v731 = vsub.f32 %v725, %v730
        %v732 = vmul.f32 %v731, 1.442695
        %v733 = vpow.pop %v732
        %v734 = vsel %vm493, %v733, 0.0
        %735 = vadd.xlane.f32.xlu0 %v734
        %v736 = vpop.xlane.xlu0 %735
        %v737 = vrcp.pop %v736
        %v738 = vmul.f32 %v736, %v737
        %v739 = vsub.f32 1.0, %v738
        %v740 = vmul.f32 %v737, %v739
        %v741 = vadd.f32 %v737, %v740
        %vm742 = vweird.f32 %v736
        %vm743 = vweird.f32 %v737
        %vm744 = vmor %vm742, %vm743
        %v745 = vsel %vm744, %v737, %v741
        %v746 = vand.u32 2147483647, %v736
        %vm747 = vcmp.eq.f32.partialorder %v746, 8.507059e+37
        %v748 = vand.u32 %v736, 2147483648
        %v749 = vor.u32 1.1754944e-38, %v748
        %v750 = vsel %vm747, %v749, %v745
        %v751 = vmul.f32 %v733, %v750
        %v752 = vpack.c.bf16 %v751, %v751
        %753 = vrot.lane.b32.xlu0 %v614, 104
        %v754 = vpop.permute.xlu0 %753
        %v756 = vsel %vm493, %v752, 0
        %v759 = vsel %vm541, %v754, 0
        %761 = vmatpush.bf16.msra.mxu0 0
        %762 = vmatpush.bf16.msra.mxu0 0
        %763 = vmatpush.bf16.msra.mxu0 0
        %764 = vmatpush.bf16.msra.mxu0 0
        %765 = vmatpush.bf16.msra.mxu0 0
        %766 = vmatpush.bf16.msra.mxu0 0
        %767 = vmatpush.bf16.msra.mxu0 0
        %768 = vmatpush.bf16.msra.mxu0 %v759
        %769 = vmatmul.bf16.gmra.mxu0 %v756
        %v770 = vpop.f32.mrf.mxu0
        %v771 = vadd.f32 0.0, %v770
        %v772 = vpop.f32.mrf.mxu0
        %773 = vdwg.mxu0
        %775 = vrot.lane.b32.xlu0 %v633, 8
        %v776 = vpop.permute.xlu0 %775
        %779 = vrot.lane.b32.xlu0 %v702, 16
        %v780 = vpop.permute.xlu0 %779
        %783 = vrot.lane.b32.xlu0 %v771, 24
        %v784 = vpop.permute.xlu0 %783
        %v786 = vsel %vm493, %v555, %v776
        %v787 = vsel %vm426, %v786, %v780
        %vm788 = vcmask 195584
        %v789 = vsel %vm788, %v787, %v784
        %vm790 = vcmask 261120
        %v791 = vsel %vm790, %v789, 0.0
        %v792 = vadd.f32 %v440, %v791
        %v793 = vpack.c.bf16 %v792, %v792
        %v794 = vld [vmem:[#allocation10] sm:$0xf]
        %v795 = vld [vmem:[#allocation10 + $0x4] sm:$0xf]
        %v796 = vld [vmem:[#allocation10 + $0x8] sm:$0xf]
        %v797 = vld [vmem:[#allocation10 + $0xc] sm:$0xf]
        %v798 = vld [vmem:[#allocation10 + $0x10] sm:$0xf]
        %v799 = vld [vmem:[#allocation10 + $0x14] sm:$0xf]
        %v800 = vld [vmem:[#allocation10 + $0x18] sm:$0xf]
        %v801 = vld [vmem:[#allocation10 + $0x1c] sm:$0xf]
        %v802 = vld [vmem:[#allocation10 + $0x20] sm:$0xf]
        %v803 = vld [vmem:[#allocation10 + $0x24] sm:$0xf]
        %v804 = vld [vmem:[#allocation10 + $0x28] sm:$0xf]
        %v805 = vld [vmem:[#allocation10 + $0x2c] sm:$0xf]
        %v806 = vld [vmem:[#allocation10 + $0x30] sm:$0xf]
        %v807 = vld [vmem:[#allocation10 + $0x34] sm:$0xf]
        %v808 = vld [vmem:[#allocation10 + $0x38] sm:$0xf]
        %v809 = vld [vmem:[#allocation10 + $0x3c] sm:$0xf]
        %v810 = vld [vmem:[%s7] sm:$0x1]
        %v812 = vperm.slane %v810, 0
        %v830 = vunpack.c.l.b16 %v794
        %v831 = vunpack.c.l.b16 %v795
        %v832 = vunpack.c.l.b16 %v796
        %v833 = vunpack.c.l.b16 %v797
        %v834 = vunpack.c.l.b16 %v798
        %v835 = vunpack.c.l.b16 %v799
        %v836 = vunpack.c.l.b16 %v800
        %v837 = vunpack.c.l.b16 %v801
        %v838 = vunpack.c.l.b16 %v802
        %v839 = vunpack.c.l.b16 %v803
        %v840 = vunpack.c.l.b16 %v804
        %v841 = vunpack.c.l.b16 %v805
        %v842 = vunpack.c.l.b16 %v806
        %v843 = vunpack.c.l.b16 %v807
        %v844 = vunpack.c.l.b16 %v808
        %v845 = vunpack.c.l.b16 %v809
        %v846 = vpack.c.b16 %v831, %v830
        %v847 = vpack.c.b16 %v833, %v832
        %v848 = vpack.c.b16 %v835, %v834
        %v849 = vpack.c.b16 %v837, %v836
        %v850 = vpack.c.b16 %v839, %v838
        %v851 = vpack.c.b16 %v841, %v840
        %v852 = vpack.c.b16 %v843, %v842
        %v853 = vpack.c.b16 %v845, %v844
        %862 = vmatpush.bf16.msra.mxu0 %v853
        %863 = vmatpush.bf16.msra.mxu0 %v852
        %864 = vmatpush.bf16.msra.mxu0 %v851
        %865 = vmatpush.bf16.msra.mxu0 %v850
        %866 = vmatpush.bf16.msra.mxu0 %v849
        %867 = vmatpush.bf16.msra.mxu0 %v848
        %868 = vmatpush.bf16.msra.mxu0 %v847
        %869 = vmatpush.bf16.msra.mxu0 %v846
        %870 = vmatmul.bf16.gmra.mxu0 %v793
        %v871 = vpop.f32.mrf.mxu0
        %v872 = vadd.f32 %v812, %v871
        %v873 = vpop.f32.mrf.mxu0
        %874 = vdwg.mxu0
        %v875 = vmax.f32 %v872, 0.0
        %v876 = vadd.f32 %v792, %v875
        %877 = vst [vmem:[%s410] sm:$0xff] %v876
        %s878 = sand.u32 %s215, 1
        %s879 = scalar_lea.sflag [#allocation4], %s878
        %s880 = sand.u32 %s215, 1
        %s881 = smul.addr %s880, 8
        %s882 = scalar_lea.vmem [#allocation11], %s881
        // Predicated region
        $region73: #{tpu_custom_call.1} parent=51 // pred_check
          %p883 = pneg %p225
        $region74: #{tpu_custom_call.1} parent=51 // pred_check_branch
          %885 = sbr.rel (%p883) target = $region76
        $region75: #{tpu_custom_call.1} parent=51 // pred_region
          %887 = vsyncadd %s879, 0
          %s888 = smul.addr %s29, 8
          %s889 = scalar_lea.hbm %s8, %s888
          %s891 = sshll.u32 %s882, 4
          %s892 = int_to_ptr.vmem [resolvable:$true] %s891
          %s893 = sshll.u32 %s889, 4
          %s894 = int_to_ptr.hbm [resolvable:$true] %s893
          %896 = dma.vmem_to_hbm [thread:$0]  %s892, 128, %s894, %s879
        $region76: #{tpu_custom_call.1} parent=51 // pred_fallthru
          _
      $region52: #{tpu_custom_call.1} parent=5 // pred_fallthru
        _
      %p897 = scmp.le.s32.totalorder 2, %s24
      // Predicated region
      $region77: #{tpu_custom_call.1} parent=5 // pred_check
        %p898 = pneg %p897
      $region78: #{tpu_custom_call.1} parent=5 // pred_check_branch
        %900 = sbr.rel (%p898) target = $region80
      $region79: #{tpu_custom_call.1} parent=5 // pred_region
        %s901 = ssub.s32 %s24, 2
        // Predicated region
        $region81: #{tpu_custom_call.1} parent=79 // pred_check
          %p902 = pneg %p231
        $region82: #{tpu_custom_call.1} parent=79 // pred_check_branch
          %904 = sbr.rel (%p902) target = $region84
        $region83: #{tpu_custom_call.1} parent=79 // pred_region
          %s905 = sand.u32 %s216, 1
          %s906 = scalar_lea.sflag [#allocation4], %s905
          %s907 = sand.u32 %s216, 1
          %s908 = smul.addr %s907, 8
          %s909 = scalar_lea.vmem [#allocation11], %s908
          %911 = dma.done %s906, 128
        $region84: #{tpu_custom_call.1} parent=79 // pred_fallthru
          _
      $region80: #{tpu_custom_call.1} parent=5 // pred_fallthru
        _
    $region6: #{tpu_custom_call.1} parent=1 // loop_footer
      %s28 = sadd.s32 1, %s24
    $region7: #{tpu_custom_call.1} parent=1 // loop_footer_branch
      %23 = sbr.rel target = $region3
    $region8: #{tpu_custom_call.1} parent=1 // loop_exit
      _
    %912 = vsyncpa [#allocation3], 1
    %s913 = scalar_lea.sflag [#allocation3], 1
    %914 = vsyncpa %s913, 1
    %915 = vsyncpa [#allocation6], 1
    %s916 = scalar_lea.sflag [#allocation6], 1
    %917 = vsyncpa %s916, 1
    %918 = vsyncpa [#allocation9], 1
    %919 = vsyncpa [#allocation4], 1
    %s920 = scalar_lea.sflag [#allocation4], 1
    %921 = vsyncpa %s920, 1

</llo_original>
